<compile_context>
chip_gen: v5e
topology: v5e:2x2
jax: 0.10.0
libtpu: 0.0.40
codegen_flags: <defaults>
</compile_context>

<pallas_src>
import functools

import jax
import jax.numpy as jnp
from jax.experimental import pallas as pl
from jax.experimental.pallas import tpu as pltpu

LRELU_ALPHA = 0.1


def _round_up(x, m):
    return (x + m - 1) // m * m


def _choose_tm(m):
    """Lane-tile size for the time axis: multiple of 128, >=2 grid steps when possible."""
    m128 = _round_up(m, 128)
    for cand in (1024, 512, 256, 128):
        if m128 >= 2 * cand:
            return cand
    return m128


# ----------------------------------------------------------------------------
# Pallas kernel: fused  (Cout, Kd) @ (Kd, TM)  + bias  [+ LeakyReLU(0.1)]
# ----------------------------------------------------------------------------
def _conv_mm_kernel(w_ref, p_ref, b_ref, o_ref, *, leaky):
    y = jnp.dot(w_ref[...], p_ref[...], preferred_element_type=jnp.float32)
    y = y + b_ref[...]
    if leaky:
        y = jnp.where(y > 0.0, y, LRELU_ALPHA * y)
    o_ref[...] = y.astype(o_ref.dtype)


def matmul_bias_act(w_mat, b_col, patches, cout, *, leaky):
    """w_mat: (Cout_pad, Kd_pad) bf16, b_col: (Cout_pad, 1) f32, patches: (Kd, M) f32.
    Returns (cout, M) f32 with the time axis lane-dense."""
    cout_pad, kd_pad = w_mat.shape
    kd, m = patches.shape
    tm = _choose_tm(m)
    m_pad = _round_up(m, tm)
    p = jnp.pad(patches.astype(jnp.bfloat16), ((0, kd_pad - kd), (0, m_pad - m)))

    out = pl.pallas_call(
        functools.partial(_conv_mm_kernel, leaky=leaky),
        out_shape=jax.ShapeDtypeStruct((cout_pad, m_pad), jnp.float32),
        grid=(m_pad // tm,),
        in_specs=[
            pl.BlockSpec((cout_pad, kd_pad), lambda i: (0, 0)),   # weight (resident)
            pl.BlockSpec((kd_pad, tm), lambda i: (0, i)),         # patches tile (lane-dense)
            pl.BlockSpec((cout_pad, 1), lambda i: (0, 0)),        # bias column
        ],
        out_specs=pl.BlockSpec((cout_pad, tm), lambda i: (0, i)),
        compiler_params=pltpu.CompilerParams(dimension_semantics=("parallel",)),
    )(w_mat, p, b_col)
    return out[:cout, :m]


# ----------------------------------------------------------------------------
# Conv wrapper (im2col glue in plain JAX under jit; compute in the Pallas kernel)
# ----------------------------------------------------------------------------
def _im2col_cbt(x_cbt, k, s, p):
    """x_cbt: (Cin, B, T) -> patches (Cin*K, B*T_out) using K strided slices (no gather)."""
    cin, b, t = x_cbt.shape
    t_out = (t + 2 * p - k) // s + 1
    x_pad = jnp.pad(x_cbt, ((0, 0), (0, 0), (p, p)))
    hi = s * (t_out - 1) + 1
    slabs = [x_pad[:, :, j:j + hi:s] for j in range(k)]         # K x (Cin, B, T_out)
    patches = jnp.stack(slabs, axis=1)                          # (Cin, K, B, T_out)
    return patches.reshape(cin * k, b * t_out), t_out


def conv1d_cbt(x_cbt, layer, *, leaky):
    """x_cbt: (Cin, B, T) channel-major activations.  Returns (Cout, B, T_out).
    Grouped convs are handled by the block-diagonal w_mat (single matmul)."""
    cin, b, t = x_cbt.shape
    k, s, p, cout = layer["k"], layer["stride"], layer["padding"], layer["cout"]
    patches, t_out = _im2col_cbt(x_cbt, k, s, p)
    y = matmul_bias_act(layer["w_mat"], layer["b_col"], patches, cout, leaky=leaky)
    return y.reshape(cout, b, t_out)


def avgpool1d(x, *, kernel=4, stride=2, padding=2):
    """AvgPool1d(4,2,2), count_include_pad=True (PyTorch default). Pure VPU reduction."""
    b, c, t = x.shape
    out_len = (t + 2 * padding - kernel) // stride + 1
    x_pad = jnp.pad(x, ((0, 0), (0, 0), (padding, padding)))
    hi = stride * (out_len - 1) + 1
    acc = x_pad[:, :, 0:hi:stride]
    for k in range(1, kernel):
        acc = acc + x_pad[:, :, k:k + hi:stride]
    return acc * (1.0 / kernel)


# ----------------------------------------------------------------------------
# Parameter construction (deterministic, synthetic, pre-padded matmul layout)
# ----------------------------------------------------------------------------
def get_padding(kernel_size, dilation=1):
    return int((kernel_size * dilation - dilation) / 2)


def make_conv_layer(key, cin, cout, k, stride, padding, groups=1):
    kw, kb = jax.random.split(key)
    cin_g, cout_g = cin // groups, cout // groups
    fan_in = cin_g * k
    w = jax.random.normal(kw, (cout, cin_g, k), jnp.float32) / jnp.sqrt(float(fan_in))
    bias = 0.01 * jax.random.normal(kb, (cout,), jnp.float32)

    kd = cin * k
    cout_pad = _round_up(cout, 8)
    kd_pad = _round_up(kd, 8)
    # Block-diagonal matmul weight: grouped conv becomes a single matmul against full-Cin patches.
    w_mat = jnp.zeros((cout_pad, kd_pad), jnp.float32)
    for g in range(groups):
        wg = w[g * cout_g:(g + 1) * cout_g].reshape(cout_g, cin_g * k)
        w_mat = w_mat.at[g * cout_g:(g + 1) * cout_g,
                         g * cin_g * k:(g + 1) * cin_g * k].set(wg)
    b_col = jnp.zeros((cout_pad, 1), jnp.float32).at[:cout, 0].set(bias)
    return dict(w_mat=w_mat.astype(jnp.bfloat16), b_col=b_col,
                cout=cout, k=k, stride=stride, padding=padding)


def make_scale_disc_params(key, in_channels, out_channels, kernels, strides, paddings, groups):
    params = []
    for in_c, out_c, k, s, p, g in zip(in_channels, out_channels, kernels, strides, paddings, groups):
        key, sub = jax.random.split(key)
        params.append(make_conv_layer(sub, in_c, out_c, k, s, p, groups=g))
    return params


def make_period_disc_params(key, kernel_size, stride, channels):
    convs = []
    for i in range(len(channels) - 1):
        key, sub = jax.random.split(key)
        convs.append(make_conv_layer(sub, channels[i], channels[i + 1], kernel_size,
                                     stride, get_padding(kernel_size, 1)))
    key, sub = jax.random.split(key)
    convs.append(make_conv_layer(sub, channels[-2], channels[-1], kernel_size, 1, 2))
    key, sub = jax.random.split(key)
    post = make_conv_layer(sub, channels[-1], 1, 3, 1, 1)
    return dict(convs=convs, post=post)


# ----------------------------------------------------------------------------
# Forward passes (mirror the PyTorch module structure; gt+pr batched together)
# ----------------------------------------------------------------------------
def scale_disc_forward(params, x):
    """x: (B, C, T).  Returns (final, per-layer states) in PyTorch (B, C, T) layout."""
    x_cbt = x.transpose(1, 0, 2)                      # internal channel-major (C, B, T)
    tmp = []
    n = len(params)
    for i, layer in enumerate(params):
        x_cbt = conv1d_cbt(x_cbt, layer, leaky=(i < n - 1))
        tmp.append(x_cbt.transpose(1, 0, 2))
    return tmp[-1], tmp


def _cbt_to_bchp(y_cbt, b, period):
    cout = y_cbt.shape[0]
    return y_cbt.reshape(cout, b, period, -1).transpose(1, 0, 3, 2)   # (B, C, H, P)


def period_disc_forward(params, period, x):
    """x: (B, C, T).  Returns (final, per-layer states) with state shapes (B, C, H, P)."""
    b, c, t = x.shape
    if t % period != 0:
        pad = period - t % period
        x = jnp.pad(x, ((0, 0), (0, 0), (0, pad)), mode="reflect")
        t += pad
    h = t // period
    x = x.reshape(b, c, h, period)
    # Conv2d with kernel (K,1) == 1D conv over H with the period axis folded into batch.
    x_cbt = x.transpose(1, 0, 3, 2).reshape(c, b * period, h)         # (C, B*P, H)
    tmp = []
    for layer in params["convs"]:
        x_cbt = conv1d_cbt(x_cbt, layer, leaky=True)
        tmp.append(_cbt_to_bchp(x_cbt, b, period))
    x_cbt = conv1d_cbt(x_cbt, params["post"], leaky=False)
    tmp.append(_cbt_to_bchp(x_cbt, b, period))
    return tmp[-1], tmp


def mpd_forward(mpd_params, periods, gt_audio, pr_audio):
    b = gt_audio.shape[0]
    x = jnp.concatenate([gt_audio, pr_audio], axis=0)   # shared weights -> one pass for gt & pr
    gt_finals, pr_finals, gt_states, pr_states = [], [], [], []
    for params, period in zip(mpd_params, periods):
        final, tmp = period_disc_forward(params, period, x)
        gt_finals.append(final[:b])
        pr_finals.append(final[b:])
        gt_states.append([s[:b] for s in tmp])
        pr_states.append([s[b:] for s in tmp])
    return (gt_finals, pr_finals, gt_states, pr_states)


def msd_forward(msd_params, gt_audio, pr_audio):
    b = gt_audio.shape[0]
    x = jnp.concatenate([gt_audio, pr_audio], axis=0)
    gt_finals, pr_finals, gt_states, pr_states = [], [], [], []
    for i, params in enumerate(msd_params):
        if i > 0:                                        # two AvgPool1d(4,2,2) stages
            x = avgpool1d(x)
        final, tmp = scale_disc_forward(params, x)
        gt_finals.append(final[:b])
        pr_finals.append(final[b:])
        gt_states.append([s[:b] for s in tmp])
        pr_states.append([s[b:] for s in tmp])
    return (gt_finals, pr_finals, gt_states, pr_states)


def discriminator_forward(params, gt_audio, pr_audio):
    mpd_output = mpd_forward(params["mpd"], params["periods"], gt_audio, pr_audio)
    msd_output = msd_forward(params["msd"], gt_audio, pr_audio)
    return {"mpd_output": mpd_output, "msd_output": msd_output}


# ----------------------------------------------------------------------------
# Main
# ----------------------------------------------------------------------------
if __name__ == "__main__":
    # Small synthetic config consistent with the module's constructor signature.
    MSD_IN_CHANNELS = [1, 8, 16, 16]
    MSD_OUT_CHANNELS = [8, 16, 16, 1]
    MSD_KERNELS = [5, 7, 5, 3]
    MSD_STRIDES = [1, 2, 1, 1]
    MSD_PADDINGS = [2, 3, 2, 1]
    MSD_GROUPS = [1, 4, 1, 1]

    MPD_PERIODS = [2, 3]
    MPD_KERNEL_SIZE = 5
    MPD_STRIDE = 3
    MPD_CHANNELS = [1, 8, 16, 16]

    key = jax.random.PRNGKey(0)
    k_in, k_mpd, k_msd = jax.random.split(key, 3)

    # Deterministic parameters.  weight_norm / spectral_norm are weight re-parameterizations only,
    # so synthetic raw weights are used directly.
    mpd_params = []
    for _ in MPD_PERIODS:
        k_mpd, sub = jax.random.split(k_mpd)
        mpd_params.append(make_period_disc_params(sub, MPD_KERNEL_SIZE, MPD_STRIDE, MPD_CHANNELS))
    msd_params = []
    for _ in range(3):  # spectral_norm + 2x weight_norm discriminators (same shapes)
        k_msd, sub = jax.random.split(k_msd)
        msd_params.append(make_scale_disc_params(sub, MSD_IN_CHANNELS, MSD_OUT_CHANNELS,
                                                 MSD_KERNELS, MSD_STRIDES, MSD_PADDINGS, MSD_GROUPS))
    params = {"mpd": mpd_params, "msd": msd_params, "periods": MPD_PERIODS}

    # Inputs: (batch, channels, time) — period=3 forces the reflect-pad branch (100 % 3 != 0).
    bs, c, t = 2, 1, 100
    k_gt, k_pr = jax.random.split(k_in)
    gt_audio = jax.random.normal(k_gt, (bs, c, t), jnp.float32)
    pr_audio = jax.random.normal(k_pr, (bs, c, t), jnp.float32)

    # jit the whole forward: glue ops fuse, weight padding is baked in, dispatch overhead vanishes.
    fwd = jax.jit(functools.partial(discriminator_forward, params))
    out = fwd(gt_audio, pr_audio)
    jax.tree_util.tree_map(jax.block_until_ready, out)
    print("KERNEL_OK")
</pallas_src>

<mosaic_0001>
module attributes {stable_mosaic.version = 11 : i64} {
  func.func @_conv_mm_kernel(%arg0: i32, %arg1: memref<8x8xbf16, #tpu.memory_space<vmem>>, %arg2: memref<8x128xbf16, #tpu.memory_space<vmem>>, %arg3: memref<8x1xf32, #tpu.memory_space<vmem>>, %arg4: memref<8x128xf32, #tpu.memory_space<vmem>>) attributes {dimension_semantics = [#tpu.dimension_semantics<parallel>], iteration_bounds = array<i64: 2>, scalar_prefetch = 0 : i64, scratch_operands = 0 : i64, tpu.core_type = #tpu.core_type<tc>, window_params = [{pipeline_mode = #tpu.pipeline_mode<synchronous>, transform_indices = @transform_0, window_bounds = array<i64: 8, 8>}, {transform_indices = @transform_1, window_bounds = array<i64: 8, 128>}, {pipeline_mode = #tpu.pipeline_mode<synchronous>, transform_indices = @transform_2, window_bounds = array<i64: 8, 1>}, {transform_indices = @transform_3, window_bounds = array<i64: 8, 128>}]} {
    %c0 = arith.constant 0 : index
    %c0_0 = arith.constant 0 : index
    %0 = vector.load %arg1[%c0, %c0_0] : memref<8x8xbf16, #tpu.memory_space<vmem>>, vector<8x8xbf16>
    %c0_1 = arith.constant 0 : index
    %c0_2 = arith.constant 0 : index
    %1 = vector.load %arg2[%c0_1, %c0_2] : memref<8x128xbf16, #tpu.memory_space<vmem>>, vector<8x128xbf16>
    %cst = arith.constant dense<0.000000e+00> : vector<8x128xf32>
    %2 = tpu.matmul %0, %1, %cst {dimension_numbers = #tpu.dot_dimension_numbers<[1], [0], [0], [1], [0, 0, 1, 1], [], []>} : vector<8x8xbf16>, vector<8x128xbf16>, vector<8x128xf32> -> vector<8x128xf32>
    %c0_3 = arith.constant 0 : index
    %c0_4 = arith.constant 0 : index
    %3 = vector.load %arg3[%c0_3, %c0_4] : memref<8x1xf32, #tpu.memory_space<vmem>>, vector<8x1xf32>
    %4 = vector.broadcast %3 : vector<8x1xf32> to vector<8x128xf32>
    %5 = arith.addf %2, %4 : vector<8x128xf32>
    %cst_5 = arith.constant 0.000000e+00 : f32
    %6 = vector.broadcast %cst_5 : f32 to vector<8x128xf32>
    %7 = arith.cmpf ogt, %5, %6 : vector<8x128xf32>
    %cst_6 = arith.constant 1.000000e-01 : f32
    %8 = vector.broadcast %cst_6 : f32 to vector<8x128xf32>
    %9 = arith.mulf %8, %5 : vector<8x128xf32>
    %10 = arith.select %7, %5, %9 : vector<8x128xi1>, vector<8x128xf32>
    %c0_7 = arith.constant 0 : index
    %c0_8 = arith.constant 0 : index
    %11 = vector.load %arg4[%c0_7, %c0_8] : memref<8x128xf32, #tpu.memory_space<vmem>>, vector<8x128xf32>
    tpu.vector_store %arg4[%c0_7, %c0_8], %10 {strides = array<i32>} : memref<8x128xf32, #tpu.memory_space<vmem>>, vector<8x128xf32>,
    return
  }
  func.func @transform_0(%arg0: i32) -> (i32, i32) {
    %c0_i32 = arith.constant 0 : i32
    %c0_i32_0 = arith.constant 0 : i32
    %c0_i32_1 = arith.constant 0 : i32
    return %c0_i32, %c0_i32_0 : i32, i32
  }
  func.func @transform_1(%arg0: i32) -> (i32, i32) {
    %c0_i32 = arith.constant 0 : i32
    %c0_i32_0 = arith.constant 0 : i32
    return %c0_i32, %arg0 : i32, i32
  }
  func.func @transform_2(%arg0: i32) -> (i32, i32) {
    %c0_i32 = arith.constant 0 : i32
    %c0_i32_0 = arith.constant 0 : i32
    %c0_i32_1 = arith.constant 0 : i32
    return %c0_i32, %c0_i32_0 : i32, i32
  }
  func.func @transform_3(%arg0: i32) -> (i32, i32) {
    %c0_i32 = arith.constant 0 : i32
    %c0_i32_0 = arith.constant 0 : i32
    return %c0_i32, %arg0 : i32, i32
  }
}

module attributes {stable_mosaic.version = 11 : i64} {
  func.func @_conv_mm_kernel(%arg0: i32, %arg1: memref<16x40xbf16, #tpu.memory_space<vmem>>, %arg2: memref<40x128xbf16, #tpu.memory_space<vmem>>, %arg3: memref<16x1xf32, #tpu.memory_space<vmem>>, %arg4: memref<16x128xf32, #tpu.memory_space<vmem>>) attributes {dimension_semantics = [#tpu.dimension_semantics<parallel>], iteration_bounds = array<i64: 1>, scalar_prefetch = 0 : i64, scratch_operands = 0 : i64, tpu.core_type = #tpu.core_type<tc>, window_params = [{pipeline_mode = #tpu.pipeline_mode<synchronous>, transform_indices = @transform_0, window_bounds = array<i64: 16, 40>}, {transform_indices = @transform_1, window_bounds = array<i64: 40, 128>}, {pipeline_mode = #tpu.pipeline_mode<synchronous>, transform_indices = @transform_2, window_bounds = array<i64: 16, 1>}, {transform_indices = @transform_3, window_bounds = array<i64: 16, 128>}]} {
    %c0 = arith.constant 0 : index
    %c0_0 = arith.constant 0 : index
    %0 = vector.load %arg1[%c0, %c0_0] : memref<16x40xbf16, #tpu.memory_space<vmem>>, vector<16x40xbf16>
    %c0_1 = arith.constant 0 : index
    %c0_2 = arith.constant 0 : index
    %1 = vector.load %arg2[%c0_1, %c0_2] : memref<40x128xbf16, #tpu.memory_space<vmem>>, vector<40x128xbf16>
    %cst = arith.constant dense<0.000000e+00> : vector<16x128xf32>
    %2 = tpu.matmul %0, %1, %cst {dimension_numbers = #tpu.dot_dimension_numbers<[1], [0], [0], [1], [0, 0, 1, 1], [], []>} : vector<16x40xbf16>, vector<40x128xbf16>, vector<16x128xf32> -> vector<16x128xf32>
    %c0_3 = arith.constant 0 : index
    %c0_4 = arith.constant 0 : index
    %3 = vector.load %arg3[%c0_3, %c0_4] : memref<16x1xf32, #tpu.memory_space<vmem>>, vector<16x1xf32>
    %4 = vector.broadcast %3 : vector<16x1xf32> to vector<16x128xf32>
    %5 = arith.addf %2, %4 : vector<16x128xf32>
    %cst_5 = arith.constant 0.000000e+00 : f32
    %6 = vector.broadcast %cst_5 : f32 to vector<16x128xf32>
    %7 = arith.cmpf ogt, %5, %6 : vector<16x128xf32>
    %cst_6 = arith.constant 1.000000e-01 : f32
    %8 = vector.broadcast %cst_6 : f32 to vector<16x128xf32>
    %9 = arith.mulf %8, %5 : vector<16x128xf32>
    %10 = arith.select %7, %5, %9 : vector<16x128xi1>, vector<16x128xf32>
    %c0_7 = arith.constant 0 : index
    %c0_8 = arith.constant 0 : index
    %11 = vector.load %arg4[%c0_7, %c0_8] : memref<16x128xf32, #tpu.memory_space<vmem>>, vector<16x128xf32>
    tpu.vector_store %arg4[%c0_7, %c0_8], %10 {strides = array<i32>} : memref<16x128xf32, #tpu.memory_space<vmem>>, vector<16x128xf32>,
    return
  }
  func.func @transform_0(%arg0: i32) -> (i32, i32) {
    %c0_i32 = arith.constant 0 : i32
    %c0_i32_0 = arith.constant 0 : i32
    %c0_i32_1 = arith.constant 0 : i32
    return %c0_i32, %c0_i32_0 : i32, i32
  }
  func.func @transform_1(%arg0: i32) -> (i32, i32) {
    %c0_i32 = arith.constant 0 : i32
    %c0_i32_0 = arith.constant 0 : i32
    return %c0_i32, %arg0 : i32, i32
  }
  func.func @transform_2(%arg0: i32) -> (i32, i32) {
    %c0_i32 = arith.constant 0 : i32
    %c0_i32_0 = arith.constant 0 : i32
    %c0_i32_1 = arith.constant 0 : i32
    return %c0_i32, %c0_i32_0 : i32, i32
  }
  func.func @transform_3(%arg0: i32) -> (i32, i32) {
    %c0_i32 = arith.constant 0 : i32
    %c0_i32_0 = arith.constant 0 : i32
    return %c0_i32, %arg0 : i32, i32
  }
}

module attributes {stable_mosaic.version = 11 : i64} {
  func.func @_conv_mm_kernel(%arg0: i32, %arg1: memref<16x80xbf16, #tpu.memory_space<vmem>>, %arg2: memref<80x128xbf16, #tpu.memory_space<vmem>>, %arg3: memref<16x1xf32, #tpu.memory_space<vmem>>, %arg4: memref<16x128xf32, #tpu.memory_space<vmem>>) attributes {dimension_semantics = [#tpu.dimension_semantics<parallel>], iteration_bounds = array<i64: 1>, scalar_prefetch = 0 : i64, scratch_operands = 0 : i64, tpu.core_type = #tpu.core_type<tc>, window_params = [{pipeline_mode = #tpu.pipeline_mode<synchronous>, transform_indices = @transform_0, window_bounds = array<i64: 16, 80>}, {transform_indices = @transform_1, window_bounds = array<i64: 80, 128>}, {pipeline_mode = #tpu.pipeline_mode<synchronous>, transform_indices = @transform_2, window_bounds = array<i64: 16, 1>}, {transform_indices = @transform_3, window_bounds = array<i64: 16, 128>}]} {
    %c0 = arith.constant 0 : index
    %c0_0 = arith.constant 0 : index
    %0 = vector.load %arg1[%c0, %c0_0] : memref<16x80xbf16, #tpu.memory_space<vmem>>, vector<16x80xbf16>
    %c0_1 = arith.constant 0 : index
    %c0_2 = arith.constant 0 : index
    %1 = vector.load %arg2[%c0_1, %c0_2] : memref<80x128xbf16, #tpu.memory_space<vmem>>, vector<80x128xbf16>
    %cst = arith.constant dense<0.000000e+00> : vector<16x128xf32>
    %2 = tpu.matmul %0, %1, %cst {dimension_numbers = #tpu.dot_dimension_numbers<[1], [0], [0], [1], [0, 0, 1, 1], [], []>} : vector<16x80xbf16>, vector<80x128xbf16>, vector<16x128xf32> -> vector<16x128xf32>
    %c0_3 = arith.constant 0 : index
    %c0_4 = arith.constant 0 : index
    %3 = vector.load %arg3[%c0_3, %c0_4] : memref<16x1xf32, #tpu.memory_space<vmem>>, vector<16x1xf32>
    %4 = vector.broadcast %3 : vector<16x1xf32> to vector<16x128xf32>
    %5 = arith.addf %2, %4 : vector<16x128xf32>
    %cst_5 = arith.constant 0.000000e+00 : f32
    %6 = vector.broadcast %cst_5 : f32 to vector<16x128xf32>
    %7 = arith.cmpf ogt, %5, %6 : vector<16x128xf32>
    %cst_6 = arith.constant 1.000000e-01 : f32
    %8 = vector.broadcast %cst_6 : f32 to vector<16x128xf32>
    %9 = arith.mulf %8, %5 : vector<16x128xf32>
    %10 = arith.select %7, %5, %9 : vector<16x128xi1>, vector<16x128xf32>
    %c0_7 = arith.constant 0 : index
    %c0_8 = arith.constant 0 : index
    %11 = vector.load %arg4[%c0_7, %c0_8] : memref<16x128xf32, #tpu.memory_space<vmem>>, vector<16x128xf32>
    tpu.vector_store %arg4[%c0_7, %c0_8], %10 {strides = array<i32>} : memref<16x128xf32, #tpu.memory_space<vmem>>, vector<16x128xf32>,
    return
  }
  func.func @transform_0(%arg0: i32) -> (i32, i32) {
    %c0_i32 = arith.constant 0 : i32
    %c0_i32_0 = arith.constant 0 : i32
    %c0_i32_1 = arith.constant 0 : i32
    return %c0_i32, %c0_i32_0 : i32, i32
  }
  func.func @transform_1(%arg0: i32) -> (i32, i32) {
    %c0_i32 = arith.constant 0 : i32
    %c0_i32_0 = arith.constant 0 : i32
    return %c0_i32, %arg0 : i32, i32
  }
  func.func @transform_2(%arg0: i32) -> (i32, i32) {
    %c0_i32 = arith.constant 0 : i32
    %c0_i32_0 = arith.constant 0 : i32
    %c0_i32_1 = arith.constant 0 : i32
    return %c0_i32, %c0_i32_0 : i32, i32
  }
  func.func @transform_3(%arg0: i32) -> (i32, i32) {
    %c0_i32 = arith.constant 0 : i32
    %c0_i32_0 = arith.constant 0 : i32
    return %c0_i32, %arg0 : i32, i32
  }
}

module attributes {stable_mosaic.version = 11 : i64} {
  func.func @_conv_mm_kernel(%arg0: i32, %arg1: memref<8x48xbf16, #tpu.memory_space<vmem>>, %arg2: memref<48x128xbf16, #tpu.memory_space<vmem>>, %arg3: memref<8x1xf32, #tpu.memory_space<vmem>>, %arg4: memref<8x128xf32, #tpu.memory_space<vmem>>) attributes {dimension_semantics = [#tpu.dimension_semantics<parallel>], iteration_bounds = array<i64: 1>, scalar_prefetch = 0 : i64, scratch_operands = 0 : i64, tpu.core_type = #tpu.core_type<tc>, window_params = [{pipeline_mode = #tpu.pipeline_mode<synchronous>, transform_indices = @transform_0, window_bounds = array<i64: 8, 48>}, {transform_indices = @transform_1, window_bounds = array<i64: 48, 128>}, {pipeline_mode = #tpu.pipeline_mode<synchronous>, transform_indices = @transform_2, window_bounds = array<i64: 8, 1>}, {transform_indices = @transform_3, window_bounds = array<i64: 8, 128>}]} {
    %c0 = arith.constant 0 : index
    %c0_0 = arith.constant 0 : index
    %0 = vector.load %arg1[%c0, %c0_0] : memref<8x48xbf16, #tpu.memory_space<vmem>>, vector<8x48xbf16>
    %c0_1 = arith.constant 0 : index
    %c0_2 = arith.constant 0 : index
    %1 = vector.load %arg2[%c0_1, %c0_2] : memref<48x128xbf16, #tpu.memory_space<vmem>>, vector<48x128xbf16>
    %cst = arith.constant dense<0.000000e+00> : vector<8x128xf32>
    %2 = tpu.matmul %0, %1, %cst {dimension_numbers = #tpu.dot_dimension_numbers<[1], [0], [0], [1], [0, 0, 1, 1], [], []>} : vector<8x48xbf16>, vector<48x128xbf16>, vector<8x128xf32> -> vector<8x128xf32>
    %c0_3 = arith.constant 0 : index
    %c0_4 = arith.constant 0 : index
    %3 = vector.load %arg3[%c0_3, %c0_4] : memref<8x1xf32, #tpu.memory_space<vmem>>, vector<8x1xf32>
    %4 = vector.broadcast %3 : vector<8x1xf32> to vector<8x128xf32>
    %5 = arith.addf %2, %4 : vector<8x128xf32>
    %c0_5 = arith.constant 0 : index
    %c0_6 = arith.constant 0 : index
    %6 = vector.load %arg4[%c0_5, %c0_6] : memref<8x128xf32, #tpu.memory_space<vmem>>, vector<8x128xf32>
    tpu.vector_store %arg4[%c0_5, %c0_6], %5 {strides = array<i32>} : memref<8x128xf32, #tpu.memory_space<vmem>>, vector<8x128xf32>,
    return
  }
  func.func @transform_0(%arg0: i32) -> (i32, i32) {
    %c0_i32 = arith.constant 0 : i32
    %c0_i32_0 = arith.constant 0 : i32
    %c0_i32_1 = arith.constant 0 : i32
    return %c0_i32, %c0_i32_0 : i32, i32
  }
  func.func @transform_1(%arg0: i32) -> (i32, i32) {
    %c0_i32 = arith.constant 0 : i32
    %c0_i32_0 = arith.constant 0 : i32
    return %c0_i32, %arg0 : i32, i32
  }
  func.func @transform_2(%arg0: i32) -> (i32, i32) {
    %c0_i32 = arith.constant 0 : i32
    %c0_i32_0 = arith.constant 0 : i32
    %c0_i32_1 = arith.constant 0 : i32
    return %c0_i32, %c0_i32_0 : i32, i32
  }
  func.func @transform_3(%arg0: i32) -> (i32, i32) {
    %c0_i32 = arith.constant 0 : i32
    %c0_i32_0 = arith.constant 0 : i32
    return %c0_i32, %arg0 : i32, i32
  }
}

module attributes {stable_mosaic.version = 11 : i64} {
  func.func @_conv_mm_kernel(%arg0: i32, %arg1: memref<8x8xbf16, #tpu.memory_space<vmem>>, %arg2: memref<8x256xbf16, #tpu.memory_space<vmem>>, %arg3: memref<8x1xf32, #tpu.memory_space<vmem>>, %arg4: memref<8x256xf32, #tpu.memory_space<vmem>>) attributes {dimension_semantics = [#tpu.dimension_semantics<parallel>], iteration_bounds = array<i64: 2>, scalar_prefetch = 0 : i64, scratch_operands = 0 : i64, tpu.core_type = #tpu.core_type<tc>, window_params = [{pipeline_mode = #tpu.pipeline_mode<synchronous>, transform_indices = @transform_0, window_bounds = array<i64: 8, 8>}, {transform_indices = @transform_1, window_bounds = array<i64: 8, 256>}, {pipeline_mode = #tpu.pipeline_mode<synchronous>, transform_indices = @transform_2, window_bounds = array<i64: 8, 1>}, {transform_indices = @transform_3, window_bounds = array<i64: 8, 256>}]} {
    %c0 = arith.constant 0 : index
    %c0_0 = arith.constant 0 : index
    %0 = vector.load %arg1[%c0, %c0_0] : memref<8x8xbf16, #tpu.memory_space<vmem>>, vector<8x8xbf16>
    %c0_1 = arith.constant 0 : index
    %c0_2 = arith.constant 0 : index
    %1 = vector.load %arg2[%c0_1, %c0_2] : memref<8x256xbf16, #tpu.memory_space<vmem>>, vector<8x256xbf16>
    %cst = arith.constant dense<0.000000e+00> : vector<8x256xf32>
    %2 = tpu.matmul %0, %1, %cst {dimension_numbers = #tpu.dot_dimension_numbers<[1], [0], [0], [1], [0, 0, 1, 1], [], []>} : vector<8x8xbf16>, vector<8x256xbf16>, vector<8x256xf32> -> vector<8x256xf32>
    %c0_3 = arith.constant 0 : index
    %c0_4 = arith.constant 0 : index
    %3 = vector.load %arg3[%c0_3, %c0_4] : memref<8x1xf32, #tpu.memory_space<vmem>>, vector<8x1xf32>
    %4 = vector.broadcast %3 : vector<8x1xf32> to vector<8x256xf32>
    %5 = arith.addf %2, %4 : vector<8x256xf32>
    %cst_5 = arith.constant 0.000000e+00 : f32
    %6 = vector.broadcast %cst_5 : f32 to vector<8x256xf32>
    %7 = arith.cmpf ogt, %5, %6 : vector<8x256xf32>
    %cst_6 = arith.constant 1.000000e-01 : f32
    %8 = vector.broadcast %cst_6 : f32 to vector<8x256xf32>
    %9 = arith.mulf %8, %5 : vector<8x256xf32>
    %10 = arith.select %7, %5, %9 : vector<8x256xi1>, vector<8x256xf32>
    %c0_7 = arith.constant 0 : index
    %c0_8 = arith.constant 0 : index
    %11 = vector.load %arg4[%c0_7, %c0_8] : memref<8x256xf32, #tpu.memory_space<vmem>>, vector<8x256xf32>
    tpu.vector_store %arg4[%c0_7, %c0_8], %10 {strides = array<i32>} : memref<8x256xf32, #tpu.memory_space<vmem>>, vector<8x256xf32>,
    return
  }
  func.func @transform_0(%arg0: i32) -> (i32, i32) {
    %c0_i32 = arith.constant 0 : i32
    %c0_i32_0 = arith.constant 0 : i32
    %c0_i32_1 = arith.constant 0 : i32
    return %c0_i32, %c0_i32_0 : i32, i32
  }
  func.func @transform_1(%arg0: i32) -> (i32, i32) {
    %c0_i32 = arith.constant 0 : i32
    %c0_i32_0 = arith.constant 0 : i32
    return %c0_i32, %arg0 : i32, i32
  }
  func.func @transform_2(%arg0: i32) -> (i32, i32) {
    %c0_i32 = arith.constant 0 : i32
    %c0_i32_0 = arith.constant 0 : i32
    %c0_i32_1 = arith.constant 0 : i32
    return %c0_i32, %c0_i32_0 : i32, i32
  }
  func.func @transform_3(%arg0: i32) -> (i32, i32) {
    %c0_i32 = arith.constant 0 : i32
    %c0_i32_0 = arith.constant 0 : i32
    return %c0_i32, %arg0 : i32, i32
  }
}

module attributes {stable_mosaic.version = 11 : i64} {
  func.func @_conv_mm_kernel(%arg0: i32, %arg1: memref<16x56xbf16, #tpu.memory_space<vmem>>, %arg2: memref<56x128xbf16, #tpu.memory_space<vmem>>, %arg3: memref<16x1xf32, #tpu.memory_space<vmem>>, %arg4: memref<16x128xf32, #tpu.memory_space<vmem>>) attributes {dimension_semantics = [#tpu.dimension_semantics<parallel>], iteration_bounds = array<i64: 2>, scalar_prefetch = 0 : i64, scratch_operands = 0 : i64, tpu.core_type = #tpu.core_type<tc>, window_params = [{pipeline_mode = #tpu.pipeline_mode<synchronous>, transform_indices = @transform_0, window_bounds = array<i64: 16, 56>}, {transform_indices = @transform_1, window_bounds = array<i64: 56, 128>}, {pipeline_mode = #tpu.pipeline_mode<synchronous>, transform_indices = @transform_2, window_bounds = array<i64: 16, 1>}, {transform_indices = @transform_3, window_bounds = array<i64: 16, 128>}]} {
    %c0 = arith.constant 0 : index
    %c0_0 = arith.constant 0 : index
    %0 = vector.load %arg1[%c0, %c0_0] : memref<16x56xbf16, #tpu.memory_space<vmem>>, vector<16x56xbf16>
    %c0_1 = arith.constant 0 : index
    %c0_2 = arith.constant 0 : index
    %1 = vector.load %arg2[%c0_1, %c0_2] : memref<56x128xbf16, #tpu.memory_space<vmem>>, vector<56x128xbf16>
    %cst = arith.constant dense<0.000000e+00> : vector<16x128xf32>
    %2 = tpu.matmul %0, %1, %cst {dimension_numbers = #tpu.dot_dimension_numbers<[1], [0], [0], [1], [0, 0, 1, 1], [], []>} : vector<16x56xbf16>, vector<56x128xbf16>, vector<16x128xf32> -> vector<16x128xf32>
    %c0_3 = arith.constant 0 : index
    %c0_4 = arith.constant 0 : index
    %3 = vector.load %arg3[%c0_3, %c0_4] : memref<16x1xf32, #tpu.memory_space<vmem>>, vector<16x1xf32>
    %4 = vector.broadcast %3 : vector<16x1xf32> to vector<16x128xf32>
    %5 = arith.addf %2, %4 : vector<16x128xf32>
    %cst_5 = arith.constant 0.000000e+00 : f32
    %6 = vector.broadcast %cst_5 : f32 to vector<16x128xf32>
    %7 = arith.cmpf ogt, %5, %6 : vector<16x128xf32>
    %cst_6 = arith.constant 1.000000e-01 : f32
    %8 = vector.broadcast %cst_6 : f32 to vector<16x128xf32>
    %9 = arith.mulf %8, %5 : vector<16x128xf32>
    %10 = arith.select %7, %5, %9 : vector<16x128xi1>, vector<16x128xf32>
    %c0_7 = arith.constant 0 : index
    %c0_8 = arith.constant 0 : index
    %11 = vector.load %arg4[%c0_7, %c0_8] : memref<16x128xf32, #tpu.memory_space<vmem>>, vector<16x128xf32>
    tpu.vector_store %arg4[%c0_7, %c0_8], %10 {strides = array<i32>} : memref<16x128xf32, #tpu.memory_space<vmem>>, vector<16x128xf32>,
    return
  }
  func.func @transform_0(%arg0: i32) -> (i32, i32) {
    %c0_i32 = arith.constant 0 : i32
    %c0_i32_0 = arith.constant 0 : i32
    %c0_i32_1 = arith.constant 0 : i32
    return %c0_i32, %c0_i32_0 : i32, i32
  }
  func.func @transform_1(%arg0: i32) -> (i32, i32) {
    %c0_i32 = arith.constant 0 : i32
    %c0_i32_0 = arith.constant 0 : i32
    return %c0_i32, %arg0 : i32, i32
  }
  func.func @transform_2(%arg0: i32) -> (i32, i32) {
    %c0_i32 = arith.constant 0 : i32
    %c0_i32_0 = arith.constant 0 : i32
    %c0_i32_1 = arith.constant 0 : i32
    return %c0_i32, %c0_i32_0 : i32, i32
  }
  func.func @transform_3(%arg0: i32) -> (i32, i32) {
    %c0_i32 = arith.constant 0 : i32
    %c0_i32_0 = arith.constant 0 : i32
    return %c0_i32, %arg0 : i32, i32
  }
}

module attributes {stable_mosaic.version = 11 : i64} {
  func.func @_conv_mm_kernel(%arg0: i32, %arg1: memref<16x80xbf16, #tpu.memory_space<vmem>>, %arg2: memref<80x128xbf16, #tpu.memory_space<vmem>>, %arg3: memref<16x1xf32, #tpu.memory_space<vmem>>, %arg4: memref<16x128xf32, #tpu.memory_space<vmem>>) attributes {dimension_semantics = [#tpu.dimension_semantics<parallel>], iteration_bounds = array<i64: 2>, scalar_prefetch = 0 : i64, scratch_operands = 0 : i64, tpu.core_type = #tpu.core_type<tc>, window_params = [{pipeline_mode = #tpu.pipeline_mode<synchronous>, transform_indices = @transform_0, window_bounds = array<i64: 16, 80>}, {transform_indices = @transform_1, window_bounds = array<i64: 80, 128>}, {pipeline_mode = #tpu.pipeline_mode<synchronous>, transform_indices = @transform_2, window_bounds = array<i64: 16, 1>}, {transform_indices = @transform_3, window_bounds = array<i64: 16, 128>}]} {
    %c0 = arith.constant 0 : index
    %c0_0 = arith.constant 0 : index
    %0 = vector.load %arg1[%c0, %c0_0] : memref<16x80xbf16, #tpu.memory_space<vmem>>, vector<16x80xbf16>
    %c0_1 = arith.constant 0 : index
    %c0_2 = arith.constant 0 : index
    %1 = vector.load %arg2[%c0_1, %c0_2] : memref<80x128xbf16, #tpu.memory_space<vmem>>, vector<80x128xbf16>
    %cst = arith.constant dense<0.000000e+00> : vector<16x128xf32>
    %2 = tpu.matmul %0, %1, %cst {dimension_numbers = #tpu.dot_dimension_numbers<[1], [0], [0], [1], [0, 0, 1, 1], [], []>} : vector<16x80xbf16>, vector<80x128xbf16>, vector<16x128xf32> -> vector<16x128xf32>
    %c0_3 = arith.constant 0 : index
    %c0_4 = arith.constant 0 : index
    %3 = vector.load %arg3[%c0_3, %c0_4] : memref<16x1xf32, #tpu.memory_space<vmem>>, vector<16x1xf32>
    %4 = vector.broadcast %3 : vector<16x1xf32> to vector<16x128xf32>
    %5 = arith.addf %2, %4 : vector<16x128xf32>
    %cst_5 = arith.constant 0.000000e+00 : f32
    %6 = vector.broadcast %cst_5 : f32 to vector<16x128xf32>
    %7 = arith.cmpf ogt, %5, %6 : vector<16x128xf32>
    %cst_6 = arith.constant 1.000000e-01 : f32
    %8 = vector.broadcast %cst_6 : f32 to vector<16x128xf32>
    %9 = arith.mulf %8, %5 : vector<16x128xf32>
    %10 = arith.select %7, %5, %9 : vector<16x128xi1>, vector<16x128xf32>
    %c0_7 = arith.constant 0 : index
    %c0_8 = arith.constant 0 : index
    %11 = vector.load %arg4[%c0_7, %c0_8] : memref<16x128xf32, #tpu.memory_space<vmem>>, vector<16x128xf32>
    tpu.vector_store %arg4[%c0_7, %c0_8], %10 {strides = array<i32>} : memref<16x128xf32, #tpu.memory_space<vmem>>, vector<16x128xf32>,
    return
  }
  func.func @transform_0(%arg0: i32) -> (i32, i32) {
    %c0_i32 = arith.constant 0 : i32
    %c0_i32_0 = arith.constant 0 : i32
    %c0_i32_1 = arith.constant 0 : i32
    return %c0_i32, %c0_i32_0 : i32, i32
  }
  func.func @transform_1(%arg0: i32) -> (i32, i32) {
    %c0_i32 = arith.constant 0 : i32
    %c0_i32_0 = arith.constant 0 : i32
    return %c0_i32, %arg0 : i32, i32
  }
  func.func @transform_2(%arg0: i32) -> (i32, i32) {
    %c0_i32 = arith.constant 0 : i32
    %c0_i32_0 = arith.constant 0 : i32
    %c0_i32_1 = arith.constant 0 : i32
    return %c0_i32, %c0_i32_0 : i32, i32
  }
  func.func @transform_3(%arg0: i32) -> (i32, i32) {
    %c0_i32 = arith.constant 0 : i32
    %c0_i32_0 = arith.constant 0 : i32
    return %c0_i32, %arg0 : i32, i32
  }
}

module attributes {stable_mosaic.version = 11 : i64} {
  func.func @_conv_mm_kernel(%arg0: i32, %arg1: memref<8x48xbf16, #tpu.memory_space<vmem>>, %arg2: memref<48x128xbf16, #tpu.memory_space<vmem>>, %arg3: memref<8x1xf32, #tpu.memory_space<vmem>>, %arg4: memref<8x128xf32, #tpu.memory_space<vmem>>) attributes {dimension_semantics = [#tpu.dimension_semantics<parallel>], iteration_bounds = array<i64: 2>, scalar_prefetch = 0 : i64, scratch_operands = 0 : i64, tpu.core_type = #tpu.core_type<tc>, window_params = [{pipeline_mode = #tpu.pipeline_mode<synchronous>, transform_indices = @transform_0, window_bounds = array<i64: 8, 48>}, {transform_indices = @transform_1, window_bounds = array<i64: 48, 128>}, {pipeline_mode = #tpu.pipeline_mode<synchronous>, transform_indices = @transform_2, window_bounds = array<i64: 8, 1>}, {transform_indices = @transform_3, window_bounds = array<i64: 8, 128>}]} {
    %c0 = arith.constant 0 : index
    %c0_0 = arith.constant 0 : index
    %0 = vector.load %arg1[%c0, %c0_0] : memref<8x48xbf16, #tpu.memory_space<vmem>>, vector<8x48xbf16>
    %c0_1 = arith.constant 0 : index
    %c0_2 = arith.constant 0 : index
    %1 = vector.load %arg2[%c0_1, %c0_2] : memref<48x128xbf16, #tpu.memory_space<vmem>>, vector<48x128xbf16>
    %cst = arith.constant dense<0.000000e+00> : vector<8x128xf32>
    %2 = tpu.matmul %0, %1, %cst {dimension_numbers = #tpu.dot_dimension_numbers<[1], [0], [0], [1], [0, 0, 1, 1], [], []>} : vector<8x48xbf16>, vector<48x128xbf16>, vector<8x128xf32> -> vector<8x128xf32>
    %c0_3 = arith.constant 0 : index
    %c0_4 = arith.constant 0 : index
    %3 = vector.load %arg3[%c0_3, %c0_4] : memref<8x1xf32, #tpu.memory_space<vmem>>, vector<8x1xf32>
    %4 = vector.broadcast %3 : vector<8x1xf32> to vector<8x128xf32>
    %5 = arith.addf %2, %4 : vector<8x128xf32>
    %c0_5 = arith.constant 0 : index
    %c0_6 = arith.constant 0 : index
    %6 = vector.load %arg4[%c0_5, %c0_6] : memref<8x128xf32, #tpu.memory_space<vmem>>, vector<8x128xf32>
    tpu.vector_store %arg4[%c0_5, %c0_6], %5 {strides = array<i32>} : memref<8x128xf32, #tpu.memory_space<vmem>>, vector<8x128xf32>,
    return
  }
  func.func @transform_0(%arg0: i32) -> (i32, i32) {
    %c0_i32 = arith.constant 0 : i32
    %c0_i32_0 = arith.constant 0 : i32
    %c0_i32_1 = arith.constant 0 : i32
    return %c0_i32, %c0_i32_0 : i32, i32
  }
  func.func @transform_1(%arg0: i32) -> (i32, i32) {
    %c0_i32 = arith.constant 0 : i32
    %c0_i32_0 = arith.constant 0 : i32
    return %c0_i32, %arg0 : i32, i32
  }
  func.func @transform_2(%arg0: i32) -> (i32, i32) {
    %c0_i32 = arith.constant 0 : i32
    %c0_i32_0 = arith.constant 0 : i32
    %c0_i32_1 = arith.constant 0 : i32
    return %c0_i32, %c0_i32_0 : i32, i32
  }
  func.func @transform_3(%arg0: i32) -> (i32, i32) {
    %c0_i32 = arith.constant 0 : i32
    %c0_i32_0 = arith.constant 0 : i32
    return %c0_i32, %arg0 : i32, i32
  }
}

module attributes {stable_mosaic.version = 11 : i64} {
  func.func @_conv_mm_kernel(%arg0: i32, %arg1: memref<16x56xbf16, #tpu.memory_space<vmem>>, %arg2: memref<56x128xbf16, #tpu.memory_space<vmem>>, %arg3: memref<16x1xf32, #tpu.memory_space<vmem>>, %arg4: memref<16x128xf32, #tpu.memory_space<vmem>>) attributes {dimension_semantics = [#tpu.dimension_semantics<parallel>], iteration_bounds = array<i64: 1>, scalar_prefetch = 0 : i64, scratch_operands = 0 : i64, tpu.core_type = #tpu.core_type<tc>, window_params = [{pipeline_mode = #tpu.pipeline_mode<synchronous>, transform_indices = @transform_0, window_bounds = array<i64: 16, 56>}, {transform_indices = @transform_1, window_bounds = array<i64: 56, 128>}, {pipeline_mode = #tpu.pipeline_mode<synchronous>, transform_indices = @transform_2, window_bounds = array<i64: 16, 1>}, {transform_indices = @transform_3, window_bounds = array<i64: 16, 128>}]} {
    %c0 = arith.constant 0 : index
    %c0_0 = arith.constant 0 : index
    %0 = vector.load %arg1[%c0, %c0_0] : memref<16x56xbf16, #tpu.memory_space<vmem>>, vector<16x56xbf16>
    %c0_1 = arith.constant 0 : index
    %c0_2 = arith.constant 0 : index
    %1 = vector.load %arg2[%c0_1, %c0_2] : memref<56x128xbf16, #tpu.memory_space<vmem>>, vector<56x128xbf16>
    %cst = arith.constant dense<0.000000e+00> : vector<16x128xf32>
    %2 = tpu.matmul %0, %1, %cst {dimension_numbers = #tpu.dot_dimension_numbers<[1], [0], [0], [1], [0, 0, 1, 1], [], []>} : vector<16x56xbf16>, vector<56x128xbf16>, vector<16x128xf32> -> vector<16x128xf32>
    %c0_3 = arith.constant 0 : index
    %c0_4 = arith.constant 0 : index
    %3 = vector.load %arg3[%c0_3, %c0_4] : memref<16x1xf32, #tpu.memory_space<vmem>>, vector<16x1xf32>
    %4 = vector.broadcast %3 : vector<16x1xf32> to vector<16x128xf32>
    %5 = arith.addf %2, %4 : vector<16x128xf32>
    %cst_5 = arith.constant 0.000000e+00 : f32
    %6 = vector.broadcast %cst_5 : f32 to vector<16x128xf32>
    %7 = arith.cmpf ogt, %5, %6 : vector<16x128xf32>
    %cst_6 = arith.constant 1.000000e-01 : f32
    %8 = vector.broadcast %cst_6 : f32 to vector<16x128xf32>
    %9 = arith.mulf %8, %5 : vector<16x128xf32>
    %10 = arith.select %7, %5, %9 : vector<16x128xi1>, vector<16x128xf32>
    %c0_7 = arith.constant 0 : index
    %c0_8 = arith.constant 0 : index
    %11 = vector.load %arg4[%c0_7, %c0_8] : memref<16x128xf32, #tpu.memory_space<vmem>>, vector<16x128xf32>
    tpu.vector_store %arg4[%c0_7, %c0_8], %10 {strides = array<i32>} : memref<16x128xf32, #tpu.memory_space<vmem>>, vector<16x128xf32>,
    return
  }
  func.func @transform_0(%arg0: i32) -> (i32, i32) {
    %c0_i32 = arith.constant 0 : i32
    %c0_i32_0 = arith.constant 0 : i32
    %c0_i32_1 = arith.constant 0 : i32
    return %c0_i32, %c0_i32_0 : i32, i32
  }
  func.func @transform_1(%arg0: i32) -> (i32, i32) {
    %c0_i32 = arith.constant 0 : i32
    %c0_i32_0 = arith.constant 0 : i32
    return %c0_i32, %arg0 : i32, i32
  }
  func.func @transform_2(%arg0: i32) -> (i32, i32) {
    %c0_i32 = arith.constant 0 : i32
    %c0_i32_0 = arith.constant 0 : i32
    %c0_i32_1 = arith.constant 0 : i32
    return %c0_i32, %c0_i32_0 : i32, i32
  }
  func.func @transform_3(%arg0: i32) -> (i32, i32) {
    %c0_i32 = arith.constant 0 : i32
    %c0_i32_0 = arith.constant 0 : i32
    return %c0_i32, %arg0 : i32, i32
  }
}

module attributes {stable_mosaic.version = 11 : i64} {
  func.func @_conv_mm_kernel(%arg0: i32, %arg1: memref<8x8xbf16, #tpu.memory_space<vmem>>, %arg2: memref<8x128xbf16, #tpu.memory_space<vmem>>, %arg3: memref<8x1xf32, #tpu.memory_space<vmem>>, %arg4: memref<8x128xf32, #tpu.memory_space<vmem>>) attributes {dimension_semantics = [#tpu.dimension_semantics<parallel>], iteration_bounds = array<i64: 1>, scalar_prefetch = 0 : i64, scratch_operands = 0 : i64, tpu.core_type = #tpu.core_type<tc>, window_params = [{pipeline_mode = #tpu.pipeline_mode<synchronous>, transform_indices = @transform_0, window_bounds = array<i64: 8, 8>}, {transform_indices = @transform_1, window_bounds = array<i64: 8, 128>}, {pipeline_mode = #tpu.pipeline_mode<synchronous>, transform_indices = @transform_2, window_bounds = array<i64: 8, 1>}, {transform_indices = @transform_3, window_bounds = array<i64: 8, 128>}]} {
    %c0 = arith.constant 0 : index
    %c0_0 = arith.constant 0 : index
    %0 = vector.load %arg1[%c0, %c0_0] : memref<8x8xbf16, #tpu.memory_space<vmem>>, vector<8x8xbf16>
    %c0_1 = arith.constant 0 : index
    %c0_2 = arith.constant 0 : index
    %1 = vector.load %arg2[%c0_1, %c0_2] : memref<8x128xbf16, #tpu.memory_space<vmem>>, vector<8x128xbf16>
    %cst = arith.constant dense<0.000000e+00> : vector<8x128xf32>
    %2 = tpu.matmul %0, %1, %cst {dimension_numbers = #tpu.dot_dimension_numbers<[1], [0], [0], [1], [0, 0, 1, 1], [], []>} : vector<8x8xbf16>, vector<8x128xbf16>, vector<8x128xf32> -> vector<8x128xf32>
    %c0_3 = arith.constant 0 : index
    %c0_4 = arith.constant 0 : index
    %3 = vector.load %arg3[%c0_3, %c0_4] : memref<8x1xf32, #tpu.memory_space<vmem>>, vector<8x1xf32>
    %4 = vector.broadcast %3 : vector<8x1xf32> to vector<8x128xf32>
    %5 = arith.addf %2, %4 : vector<8x128xf32>
    %cst_5 = arith.constant 0.000000e+00 : f32
    %6 = vector.broadcast %cst_5 : f32 to vector<8x128xf32>
    %7 = arith.cmpf ogt, %5, %6 : vector<8x128xf32>
    %cst_6 = arith.constant 1.000000e-01 : f32
    %8 = vector.broadcast %cst_6 : f32 to vector<8x128xf32>
    %9 = arith.mulf %8, %5 : vector<8x128xf32>
    %10 = arith.select %7, %5, %9 : vector<8x128xi1>, vector<8x128xf32>
    %c0_7 = arith.constant 0 : index
    %c0_8 = arith.constant 0 : index
    %11 = vector.load %arg4[%c0_7, %c0_8] : memref<8x128xf32, #tpu.memory_space<vmem>>, vector<8x128xf32>
    tpu.vector_store %arg4[%c0_7, %c0_8], %10 {strides = array<i32>} : memref<8x128xf32, #tpu.memory_space<vmem>>, vector<8x128xf32>,
    return
  }
  func.func @transform_0(%arg0: i32) -> (i32, i32) {
    %c0_i32 = arith.constant 0 : i32
    %c0_i32_0 = arith.constant 0 : i32
    %c0_i32_1 = arith.constant 0 : i32
    return %c0_i32, %c0_i32_0 : i32, i32
  }
  func.func @transform_1(%arg0: i32) -> (i32, i32) {
    %c0_i32 = arith.constant 0 : i32
    %c0_i32_0 = arith.constant 0 : i32
    return %c0_i32, %arg0 : i32, i32
  }
  func.func @transform_2(%arg0: i32) -> (i32, i32) {
    %c0_i32 = arith.constant 0 : i32
    %c0_i32_0 = arith.constant 0 : i32
    %c0_i32_1 = arith.constant 0 : i32
    return %c0_i32, %c0_i32_0 : i32, i32
  }
  func.func @transform_3(%arg0: i32) -> (i32, i32) {
    %c0_i32 = arith.constant 0 : i32
    %c0_i32_0 = arith.constant 0 : i32
    return %c0_i32, %arg0 : i32, i32
  }
}

</mosaic_0001>

<llo_original>
// kernel: discriminator_forward.22
$region0: #{discriminator_forward.22}
  #allocation0 [shape = 'u32[]', space=smem, size = 0x4, offset = 0x4, fixed_abs, tag = 'smem constant byte address 0x4 - core index']
  #allocation1 [shape = 'u32[72,128]{1,0:T(1,128)}', space=vmem, size = 0x9000, scoped, tag = 'internal scratch']
  %s0 = inlined_call_operand.vmem [shape: bf16[8,8], index: 0, kind: input, shape index: {}]
  %s1 = inlined_call_operand.vmem [shape: bf16[8,256], index: 1, kind: input, shape index: {}]
  %s2 = inlined_call_operand.vmem [shape: f32[8,1], index: 2, kind: input, shape index: {}]
  %s3 = inlined_call_operand.vmem [shape: f32[8,256], index: 3, kind: output, shape index: {}]
  %s4 = sld [smem:[#allocation0]]
  $region45: #{discriminator_forward.22} parent=0
    _
  %s6 = ssub.s32 1, %s4
  %s7 = scalar_select 0, %s6, %s4
  loop: start=0, step=1, limit=4
  $region2: #{discriminator_forward.22} parent=0 // loop_pre_header
    _
  $region3: #{discriminator_forward.22} parent=0 // loop_header
    %s9 = sphi 0, %s13
    %p10 = scmp.ge.s32.totalorder %s9, 4
    %s17 = sphi 0, %s17
    %s19 = sphi 0, %s17
    %s20 = sphi 0, %s19
    %s34 = sphi 0, %s20
    %s40 = sphi 0, %s42
    %s43 = sphi 0, %s40
    %s44 = sphi 0, %s43
    %s60 = sphi 0, %s44
    %s64 = sphi 0, %s64
    %s66 = sphi 0, %s64
    %s67 = sphi 0, %s66
    %s81 = sphi 0, %s67
    %s87 = sphi 0, %s89
    %s90 = sphi 0, %s87
    %s91 = sphi 0, %s90
    %s107 = sphi 0, %s91
  $region4: #{discriminator_forward.22} parent=0 // loop_header_branch
    %12 = sbr.rel (%p10) target = $region8
  $region5: #{discriminator_forward.22} parent=0 // loop_body
    %s14 = ssub.s32 %s9, 1
    %s15 = ssub.s32 %s9, 2
    %s16 = sadd.s32 %s9, 1
    %s18 = sadd.s32 %s17, 1
    %p21 = scmp.eq.s32.totalorder %s9, 1
    %p22 = scmp.ne.s32.totalorder %s17, %s19
    %p23 = scmp.eq.s32.totalorder %s9, 0
    %p24 = por %p22, %p23
    %p25 = scmp.ne.s32.totalorder %s17, %s19
    %p26 = scmp.eq.s32.totalorder %s14, 1
    %p27 = por %p25, %p26
    %p28 = scmp.ne.s32.totalorder %s19, %s20
    %p29 = scmp.eq.s32.totalorder %s14, 0
    %p30 = por %p28, %p29
    %p31 = scmp.ne.s32.totalorder %s19, %s20
    %p32 = scmp.eq.s32.totalorder %s15, 1
    %p33 = por %p31, %p32
    %p35 = scmp.ne.s32.totalorder %s20, %s34
    %p36 = scmp.eq.s32.totalorder %s15, 0
    %p37 = por %p35, %p36
    %s38 = ssub.s32 %s9, %s16
    %p39 = scmp.eq.s32.totalorder %s38, 0
    %s41 = sadd.s32 %s40, 1
    %s42 = scalar_select %p39, %s40, %s41
    %p45 = pneg %p39
    %p46 = scmp.eq.s32.totalorder %s9, 1
    %p47 = por %p45, %p46
    %p48 = scmp.ne.s32.totalorder %s40, %s43
    %p49 = scmp.eq.s32.totalorder %s9, 0
    %p50 = por %p48, %p49
    %p51 = scmp.ne.s32.totalorder %s40, %s43
    %p52 = scmp.eq.s32.totalorder %s14, 1
    %p53 = por %p51, %p52
    %p54 = scmp.ne.s32.totalorder %s43, %s44
    %p55 = scmp.eq.s32.totalorder %s14, 0
    %p56 = por %p54, %p55
    %p57 = scmp.ne.s32.totalorder %s43, %s44
    %p58 = scmp.eq.s32.totalorder %s15, 1
    %p59 = por %p57, %p58
    %p61 = scmp.ne.s32.totalorder %s44, %s60
    %p62 = scmp.eq.s32.totalorder %s15, 0
    %p63 = por %p61, %p62
    %s65 = sadd.s32 %s64, 1
    %p68 = scmp.eq.s32.totalorder %s9, 1
    %p69 = scmp.ne.s32.totalorder %s64, %s66
    %p70 = scmp.eq.s32.totalorder %s9, 0
    %p71 = por %p69, %p70
    %p72 = scmp.ne.s32.totalorder %s64, %s66
    %p73 = scmp.eq.s32.totalorder %s14, 1
    %p74 = por %p72, %p73
    %p75 = scmp.ne.s32.totalorder %s66, %s67
    %p76 = scmp.eq.s32.totalorder %s14, 0
    %p77 = por %p75, %p76
    %p78 = scmp.ne.s32.totalorder %s66, %s67
    %p79 = scmp.eq.s32.totalorder %s15, 1
    %p80 = por %p78, %p79
    %p82 = scmp.ne.s32.totalorder %s67, %s81
    %p83 = scmp.eq.s32.totalorder %s15, 0
    %p84 = por %p82, %p83
    %s85 = ssub.s32 %s9, %s16
    %p86 = scmp.eq.s32.totalorder %s85, 0
    %s88 = sadd.s32 %s87, 1
    %s89 = scalar_select %p86, %s87, %s88
    %p92 = pneg %p86
    %p93 = scmp.eq.s32.totalorder %s9, 1
    %p94 = por %p92, %p93
    %p95 = scmp.ne.s32.totalorder %s87, %s90
    %p96 = scmp.eq.s32.totalorder %s9, 0
    %p97 = por %p95, %p96
    %p98 = scmp.ne.s32.totalorder %s87, %s90
    %p99 = scmp.eq.s32.totalorder %s14, 1
    %p100 = por %p98, %p99
    %p101 = scmp.ne.s32.totalorder %s90, %s91
    %p102 = scmp.eq.s32.totalorder %s14, 0
    %p103 = por %p101, %p102
    %p104 = scmp.ne.s32.totalorder %s90, %s91
    %p105 = scmp.eq.s32.totalorder %s15, 1
    %p106 = por %p104, %p105
    %p108 = scmp.ne.s32.totalorder %s91, %s107
    %p109 = scmp.eq.s32.totalorder %s15, 0
    %p110 = por %p108, %p109
    %p111 = scmp.le.s32.totalorder 1, %s9
    %p112 = scmp.lt.s32.totalorder %s9, 3
    %p113 = pnand %p111, %p112
    %p114 = pneg %p113
    // Predicated region
    $region9: #{discriminator_forward.22} parent=5 // pred_check
      _
    $region10: #{discriminator_forward.22} parent=5 // pred_check_branch
      %116 = sbr.rel (%p113) target = $region12
    $region11: #{discriminator_forward.22} parent=5 // pred_region
      %s117 = ssub.s32 %s9, 1
      // Predicated region
      $region13: #{discriminator_forward.22} parent=11 // pred_check
        %p118 = pneg %p30
      $region14: #{discriminator_forward.22} parent=11 // pred_check_branch
        %120 = sbr.rel (%p118) target = $region16
      $region15: #{discriminator_forward.22} parent=11 // pred_region
        _
      $region16: #{discriminator_forward.22} parent=11 // pred_fallthru
        _
      // Predicated region
      $region17: #{discriminator_forward.22} parent=11 // pred_check
        %p121 = pneg %p77
      $region18: #{discriminator_forward.22} parent=11 // pred_check_branch
        %123 = sbr.rel (%p121) target = $region20
      $region19: #{discriminator_forward.22} parent=11 // pred_region
        _
      $region20: #{discriminator_forward.22} parent=11 // pred_fallthru
        _
    $region12: #{discriminator_forward.22} parent=5 // pred_fallthru
      _
    %p124 = scmp.lt.s32.totalorder %s9, 2
    // Predicated region
    $region21: #{discriminator_forward.22} parent=5 // pred_check
      %p125 = pneg %p124
    $region22: #{discriminator_forward.22} parent=5 // pred_check_branch
      %127 = sbr.rel (%p125) target = $region24
    $region23: #{discriminator_forward.22} parent=5 // pred_region
      // Predicated region
      $region25: #{discriminator_forward.22} parent=23 // pred_check
        %p128 = pneg %p50
      $region26: #{discriminator_forward.22} parent=23 // pred_check_branch
        %130 = sbr.rel (%p128) target = $region28
      $region27: #{discriminator_forward.22} parent=23 // pred_region
        %p131 = scmp.lt.s32.totalorder %s9, 1
        %s132 = scalar_select %p131, %s9, 1
        %s133 = smul.addr %s132, 4
        %s134 = scalar_lea.vmem %s1, %s133
      $region28: #{discriminator_forward.22} parent=23 // pred_fallthru
        _
    $region24: #{discriminator_forward.22} parent=5 // pred_fallthru
      _
    %p135 = scmp.le.s32.totalorder 1, %s9
    %p136 = scmp.lt.s32.totalorder %s9, 3
    %p137 = pnand %p135, %p136
    %p138 = pneg %p137
    // Predicated region
    $region29: #{discriminator_forward.22} parent=5 // pred_check
      _
    $region30: #{discriminator_forward.22} parent=5 // pred_check_branch
      %140 = sbr.rel (%p137) target = $region32
    $region31: #{discriminator_forward.22} parent=5 // pred_region
      %s141 = ssub.s32 %s9, 1
      %p142 = pneg %p30
      %p143 = pneg %p27
      %p144 = scmp.lt.s32.totalorder %s14, 1
      %s145 = scalar_select %p144, %s14, 1
      %s146 = smul.addr %s145, 4
      %s147 = scalar_lea.vmem %s1, %s146
      %p148 = pneg %p56
      %p149 = pneg %p53
      %p150 = pneg %p77
      %p151 = pneg %p74
      %p152 = pneg %p103
      %p153 = pneg %p100
      %p154 = scmp.lt.s32.totalorder %s14, 1
      %s155 = scalar_select %p154, %s14, 1
      %s156 = smul.addr %s155, 8
      %s157 = scalar_lea.vmem %s3, %s156
      %p158 = scmp.lt.s32.totalorder %s14, 1
      %s159 = scalar_select %p158, %s14, 1
      %s160 = smul.addr %s159, 4
      %s161 = scalar_lea.vmem %s1, %s160
      %p162 = scmp.lt.s32.totalorder %s14, 1
      %s163 = scalar_select %p162, %s14, 1
      %s164 = smul.addr %s163, 8
      %s165 = scalar_lea.vmem %s3, %s164
      %v167 = vld [vmem:[%s0] sm:$0xf]
      %v168 = vld [vmem:[%s161] sm:$0xf]
      %v169 = vld [vmem:[%s2] sm:$0xff]
      %171 = vset.pattern.permute.xlu0 0
      %172 = vperm.xlu0 %171, %v169
      %v173 = vpop.permute.xlu0 %172
      %vm175 = vcmask 64512
      %v177 = vsel %vm175, %v167, 0
      %vm179 = vcmask 1043456
      %v181 = vsel %vm179, %v168, 0
      %183 = vmatpush.bf16.msra.mxu0 0
      %184 = vmatpush.bf16.msra.mxu0 0
      %185 = vmatpush.bf16.msra.mxu0 0
      %186 = vmatpush.bf16.msra.mxu0 0
      %187 = vmatpush.bf16.msra.mxu0 0
      %188 = vmatpush.bf16.msra.mxu0 0
      %189 = vmatpush.bf16.msra.mxu0 0
      %190 = vmatpush.bf16.msra.mxu0 %v181
      %191 = vmatmul.bf16.gmra.mxu0 %v177
      %v192 = vpop.f32.mrf.mxu0
      %v193 = vadd.f32 %v173, %v192
      %v194 = vpop.f32.mrf.mxu0
      %195 = vdwg.mxu0
      %vm196 = vcmp.gt.f32.partialorder %v193, 0.0
      %v197 = vmul.f32 %v193, 0.1
      %v198 = vsel %vm196, %v193, %v197
      %199 = vst [vmem:[%s165] sm:$0xff] %v198
      %p200 = scmp.lt.s32.totalorder %s14, 1
      %s201 = scalar_select %p200, %s14, 1
      %s202 = smul.addr %s201, 8
      %s203 = scalar_lea.vmem %s3, %s202
      // Predicated region
      $region33: #{discriminator_forward.22} parent=31 // pred_check
        %p204 = pneg %p100
      $region34: #{discriminator_forward.22} parent=31 // pred_check_branch
        %206 = sbr.rel (%p204) target = $region36
      $region35: #{discriminator_forward.22} parent=31 // pred_region
        _
      $region36: #{discriminator_forward.22} parent=31 // pred_fallthru
        _
    $region32: #{discriminator_forward.22} parent=5 // pred_fallthru
      _
    %p207 = scmp.le.s32.totalorder 2, %s9
    // Predicated region
    $region37: #{discriminator_forward.22} parent=5 // pred_check
      %p208 = pneg %p207
    $region38: #{discriminator_forward.22} parent=5 // pred_check_branch
      %210 = sbr.rel (%p208) target = $region40
    $region39: #{discriminator_forward.22} parent=5 // pred_region
      %s211 = ssub.s32 %s9, 2
      // Predicated region
      $region41: #{discriminator_forward.22} parent=39 // pred_check
        %p212 = pneg %p106
      $region42: #{discriminator_forward.22} parent=39 // pred_check_branch
        %214 = sbr.rel (%p212) target = $region44
      $region43: #{discriminator_forward.22} parent=39 // pred_region
        %p215 = scmp.lt.s32.totalorder %s15, 1
        %s216 = scalar_select %p215, %s15, 1
        %s217 = smul.addr %s216, 8
        %s218 = scalar_lea.vmem %s3, %s217
      $region44: #{discriminator_forward.22} parent=39 // pred_fallthru
        _
    $region40: #{discriminator_forward.22} parent=5 // pred_fallthru
      _
  $region6: #{discriminator_forward.22} parent=0 // loop_footer
    %s13 = sadd.s32 1, %s9
  $region7: #{discriminator_forward.22} parent=0 // loop_footer_branch
    %8 = sbr.rel target = $region3
  $region8: #{discriminator_forward.22} parent=0 // loop_exit
    _

// kernel: discriminator_forward.23
$region0: #{discriminator_forward.23}
  #allocation0 [shape = 'u32[]', space=smem, size = 0x4, offset = 0x4, fixed_abs, tag = 'smem constant byte address 0x4 - core index']
  #allocation1 [shape = 'u32[72,128]{1,0:T(1,128)}', space=vmem, size = 0x9000, scoped, tag = 'internal scratch']
  %s0 = inlined_call_operand.vmem [shape: bf16[16,40], index: 0, kind: input, shape index: {}]
  %s1 = inlined_call_operand.vmem [shape: bf16[40,128], index: 1, kind: input, shape index: {}]
  %s2 = inlined_call_operand.vmem [shape: f32[16,1], index: 2, kind: input, shape index: {}]
  %s3 = inlined_call_operand.vmem [shape: f32[16,128], index: 3, kind: output, shape index: {}]
  %s4 = sld [smem:[#allocation0]]
  $region22: #{discriminator_forward.23} parent=0
    _
  %s6 = ssub.s32 1, %s4
  %s7 = scalar_select 0, %s6, %s4
  // Predicated region
  $region2: #{discriminator_forward.23} parent=0 // pred_check
    _
  $region3: #{discriminator_forward.23} parent=0 // pred_check_branch
    %9 = sbr.rel (0) target = $region5
  $region4: #{discriminator_forward.23} parent=0 // pred_region
    _
  $region5: #{discriminator_forward.23} parent=0 // pred_fallthru
    _
  // Predicated region
  $region6: #{discriminator_forward.23} parent=0 // pred_check
    _
  $region7: #{discriminator_forward.23} parent=0 // pred_check_branch
    %11 = sbr.rel (0) target = $region9
  $region8: #{discriminator_forward.23} parent=0 // pred_region
    _
  $region9: #{discriminator_forward.23} parent=0 // pred_fallthru
    _
  // Predicated region
  $region10: #{discriminator_forward.23} parent=0 // pred_check
    _
  $region11: #{discriminator_forward.23} parent=0 // pred_check_branch
    %13 = sbr.rel (0) target = $region13
  $region12: #{discriminator_forward.23} parent=0 // pred_region
    _
  $region13: #{discriminator_forward.23} parent=0 // pred_fallthru
    _
  %v15 = vld [vmem:[%s0] sm:$0xf]
  %v16 = vld [vmem:[%s0 + $0x4] sm:$0xf]
  %v17 = vld [vmem:[%s1] sm:$0xf]
  %v18 = vld [vmem:[%s1 + $0x4] sm:$0xf]
  %v19 = vld [vmem:[%s1 + $0x8] sm:$0xf]
  %v20 = vld [vmem:[%s1 + $0xc] sm:$0xf]
  %v21 = vld [vmem:[%s1 + $0x10] sm:$0xf]
  %v22 = vld [vmem:[%s2] sm:$0xff]
  %v23 = vld [vmem:[%s2 + $0x8] sm:$0xff]
  %25 = vset.pattern.permute.xlu0 0
  %26 = vperm.xlu0 %25, %v22
  %v27 = vpop.permute.xlu0 %26
  %30 = vset.pattern.permute.xlu0 0
  %31 = vperm.xlu0 %30, %v23
  %v32 = vpop.permute.xlu0 %31
  %v36 = vunpack.c.l.b16 %v15
  %v37 = vunpack.c.l.b16 %v16
  %v38 = vpack.c.b16 %v37, %v36
  %v44 = vunpack.c.l.b16 %v17
  %v45 = vunpack.c.l.b16 %v18
  %v46 = vunpack.c.l.b16 %v19
  %v47 = vunpack.c.l.b16 %v20
  %v48 = vunpack.c.l.b16 %v21
  %v49 = vpack.c.b16 %v45, %v44
  %v50 = vpack.c.b16 %v47, %v46
  %v51 = vpack.c.b16 %v48, %v48
  %vm54 = vcmask 326656
  %v56 = vsel %vm54, %v38, 0
  %vm58 = vcmask 1043456
  %v60 = vsel %vm58, %v51, 0
  %62 = vmatpush.bf16.msra.mxu0 0
  %63 = vmatpush.bf16.msra.mxu0 0
  %64 = vmatpush.bf16.msra.mxu0 0
  %65 = vmatpush.bf16.msra.mxu0 0
  %66 = vmatpush.bf16.msra.mxu0 0
  %67 = vmatpush.bf16.msra.mxu0 %v60
  %68 = vmatpush.bf16.msra.mxu0 %v50
  %69 = vmatpush.bf16.msra.mxu0 %v49
  %70 = vmatmul.bf16.gmra.mxu0 %v56
  %v71 = vpop.f32.mrf.mxu0
  %v72 = vadd.f32 %v27, %v71
  %v73 = vpop.f32.mrf.mxu0
  %v74 = vadd.f32 %v32, %v73
  %75 = vdwg.mxu0
  %vm76 = vcmp.gt.f32.partialorder %v72, 0.0
  %vm77 = vcmp.gt.f32.partialorder %v74, 0.0
  %v78 = vmul.f32 %v72, 0.1
  %v79 = vmul.f32 %v74, 0.1
  %v80 = vsel %vm76, %v72, %v78
  %v81 = vsel %vm77, %v74, %v79
  %82 = vst [vmem:[%s3] sm:$0xff] %v80
  %83 = vst [vmem:[%s3 + $0x8] sm:$0xff] %v81
  // Predicated region
  $region14: #{discriminator_forward.23} parent=0 // pred_check
    _
  $region15: #{discriminator_forward.23} parent=0 // pred_check_branch
    %85 = sbr.rel (0) target = $region17
  $region16: #{discriminator_forward.23} parent=0 // pred_region
    _
  $region17: #{discriminator_forward.23} parent=0 // pred_fallthru
    _
  // Predicated region
  $region18: #{discriminator_forward.23} parent=0 // pred_check
    _
  $region19: #{discriminator_forward.23} parent=0 // pred_check_branch
    %87 = sbr.rel (0) target = $region21
  $region20: #{discriminator_forward.23} parent=0 // pred_region
    _
  $region21: #{discriminator_forward.23} parent=0 // pred_fallthru
    _

// kernel: discriminator_forward.24
$region0: #{discriminator_forward.24}
  #allocation0 [shape = 'u32[]', space=smem, size = 0x4, offset = 0x4, fixed_abs, tag = 'smem constant byte address 0x4 - core index']
  #allocation1 [shape = 'u32[72,128]{1,0:T(1,128)}', space=vmem, size = 0x9000, scoped, tag = 'internal scratch']
  %s0 = inlined_call_operand.vmem [shape: bf16[16,80], index: 0, kind: input, shape index: {}]
  %s1 = inlined_call_operand.vmem [shape: bf16[80,128], index: 1, kind: input, shape index: {}]
  %s2 = inlined_call_operand.vmem [shape: f32[16,1], index: 2, kind: input, shape index: {}]
  %s3 = inlined_call_operand.vmem [shape: f32[16,128], index: 3, kind: output, shape index: {}]
  %s4 = sld [smem:[#allocation0]]
  $region22: #{discriminator_forward.24} parent=0
    _
  %s6 = ssub.s32 1, %s4
  %s7 = scalar_select 0, %s6, %s4
  // Predicated region
  $region2: #{discriminator_forward.24} parent=0 // pred_check
    _
  $region3: #{discriminator_forward.24} parent=0 // pred_check_branch
    %9 = sbr.rel (0) target = $region5
  $region4: #{discriminator_forward.24} parent=0 // pred_region
    _
  $region5: #{discriminator_forward.24} parent=0 // pred_fallthru
    _
  // Predicated region
  $region6: #{discriminator_forward.24} parent=0 // pred_check
    _
  $region7: #{discriminator_forward.24} parent=0 // pred_check_branch
    %11 = sbr.rel (0) target = $region9
  $region8: #{discriminator_forward.24} parent=0 // pred_region
    _
  $region9: #{discriminator_forward.24} parent=0 // pred_fallthru
    _
  // Predicated region
  $region10: #{discriminator_forward.24} parent=0 // pred_check
    _
  $region11: #{discriminator_forward.24} parent=0 // pred_check_branch
    %13 = sbr.rel (0) target = $region13
  $region12: #{discriminator_forward.24} parent=0 // pred_region
    _
  $region13: #{discriminator_forward.24} parent=0 // pred_fallthru
    _
  %v15 = vld [vmem:[%s0] sm:$0xf]
  %v16 = vld [vmem:[%s0 + $0x4] sm:$0xf]
  %v17 = vld [vmem:[%s1] sm:$0xf]
  %v18 = vld [vmem:[%s1 + $0x4] sm:$0xf]
  %v19 = vld [vmem:[%s1 + $0x8] sm:$0xf]
  %v20 = vld [vmem:[%s1 + $0xc] sm:$0xf]
  %v21 = vld [vmem:[%s1 + $0x10] sm:$0xf]
  %v22 = vld [vmem:[%s1 + $0x14] sm:$0xf]
  %v23 = vld [vmem:[%s1 + $0x18] sm:$0xf]
  %v24 = vld [vmem:[%s1 + $0x1c] sm:$0xf]
  %v25 = vld [vmem:[%s1 + $0x20] sm:$0xf]
  %v26 = vld [vmem:[%s1 + $0x24] sm:$0xf]
  %v27 = vld [vmem:[%s2] sm:$0xff]
  %v28 = vld [vmem:[%s2 + $0x8] sm:$0xff]
  %30 = vset.pattern.permute.xlu0 0
  %31 = vperm.xlu0 %30, %v27
  %v32 = vpop.permute.xlu0 %31
  %35 = vset.pattern.permute.xlu0 0
  %36 = vperm.xlu0 %35, %v28
  %v37 = vpop.permute.xlu0 %36
  %v41 = vunpack.c.l.b16 %v15
  %v42 = vunpack.c.l.b16 %v16
  %v43 = vpack.c.b16 %v42, %v41
  %v54 = vunpack.c.l.b16 %v17
  %v55 = vunpack.c.l.b16 %v18
  %v56 = vunpack.c.l.b16 %v19
  %v57 = vunpack.c.l.b16 %v20
  %v58 = vunpack.c.l.b16 %v21
  %v59 = vunpack.c.l.b16 %v22
  %v60 = vunpack.c.l.b16 %v23
  %v61 = vunpack.c.l.b16 %v24
  %v62 = vunpack.c.l.b16 %v25
  %v63 = vunpack.c.l.b16 %v26
  %v64 = vpack.c.b16 %v55, %v54
  %v65 = vpack.c.b16 %v57, %v56
  %v66 = vpack.c.b16 %v59, %v58
  %v67 = vpack.c.b16 %v61, %v60
  %v68 = vpack.c.b16 %v63, %v62
  %vm74 = vcmask 654336
  %v76 = vsel %vm74, %v43, 0
  %78 = vmatpush.bf16.msra.mxu0 0
  %79 = vmatpush.bf16.msra.mxu0 0
  %80 = vmatpush.bf16.msra.mxu0 0
  %81 = vmatpush.bf16.msra.mxu0 %v68
  %82 = vmatpush.bf16.msra.mxu0 %v67
  %83 = vmatpush.bf16.msra.mxu0 %v66
  %84 = vmatpush.bf16.msra.mxu0 %v65
  %85 = vmatpush.bf16.msra.mxu0 %v64
  %86 = vmatmul.bf16.gmra.mxu0 %v76
  %v87 = vpop.f32.mrf.mxu0
  %v88 = vadd.f32 %v32, %v87
  %v89 = vpop.f32.mrf.mxu0
  %v90 = vadd.f32 %v37, %v89
  %91 = vdwg.mxu0
  %vm92 = vcmp.gt.f32.partialorder %v88, 0.0
  %vm93 = vcmp.gt.f32.partialorder %v90, 0.0
  %v94 = vmul.f32 %v88, 0.1
  %v95 = vmul.f32 %v90, 0.1
  %v96 = vsel %vm92, %v88, %v94
  %v97 = vsel %vm93, %v90, %v95
  %98 = vst [vmem:[%s3] sm:$0xff] %v96
  %99 = vst [vmem:[%s3 + $0x8] sm:$0xff] %v97
  // Predicated region
  $region14: #{discriminator_forward.24} parent=0 // pred_check
    _
  $region15: #{discriminator_forward.24} parent=0 // pred_check_branch
    %101 = sbr.rel (0) target = $region17
  $region16: #{discriminator_forward.24} parent=0 // pred_region
    _
  $region17: #{discriminator_forward.24} parent=0 // pred_fallthru
    _
  // Predicated region
  $region18: #{discriminator_forward.24} parent=0 // pred_check
    _
  $region19: #{discriminator_forward.24} parent=0 // pred_check_branch
    %103 = sbr.rel (0) target = $region21
  $region20: #{discriminator_forward.24} parent=0 // pred_region
    _
  $region21: #{discriminator_forward.24} parent=0 // pred_fallthru
    _

// kernel: discriminator_forward.26
$region0: #{discriminator_forward.26}
  #allocation0 [shape = 'u32[]', space=smem, size = 0x4, offset = 0x4, fixed_abs, tag = 'smem constant byte address 0x4 - core index']
  #allocation1 [shape = 'u32[72,128]{1,0:T(1,128)}', space=vmem, size = 0x9000, scoped, tag = 'internal scratch']
  %s0 = inlined_call_operand.vmem [shape: bf16[8,48], index: 0, kind: input, shape index: {}]
  %s1 = inlined_call_operand.vmem [shape: bf16[48,128], index: 1, kind: input, shape index: {}]
  %s2 = inlined_call_operand.vmem [shape: f32[8,1], index: 2, kind: input, shape index: {}]
  %s3 = inlined_call_operand.vmem [shape: f32[8,128], index: 3, kind: output, shape index: {}]
  %s4 = sld [smem:[#allocation0]]
  $region22: #{discriminator_forward.26} parent=0
    _
  %s6 = ssub.s32 1, %s4
  %s7 = scalar_select 0, %s6, %s4
  // Predicated region
  $region2: #{discriminator_forward.26} parent=0 // pred_check
    _
  $region3: #{discriminator_forward.26} parent=0 // pred_check_branch
    %9 = sbr.rel (0) target = $region5
  $region4: #{discriminator_forward.26} parent=0 // pred_region
    _
  $region5: #{discriminator_forward.26} parent=0 // pred_fallthru
    _
  // Predicated region
  $region6: #{discriminator_forward.26} parent=0 // pred_check
    _
  $region7: #{discriminator_forward.26} parent=0 // pred_check_branch
    %11 = sbr.rel (0) target = $region9
  $region8: #{discriminator_forward.26} parent=0 // pred_region
    _
  $region9: #{discriminator_forward.26} parent=0 // pred_fallthru
    _
  // Predicated region
  $region10: #{discriminator_forward.26} parent=0 // pred_check
    _
  $region11: #{discriminator_forward.26} parent=0 // pred_check_branch
    %13 = sbr.rel (0) target = $region13
  $region12: #{discriminator_forward.26} parent=0 // pred_region
    _
  $region13: #{discriminator_forward.26} parent=0 // pred_fallthru
    _
  %v15 = vld [vmem:[%s0] sm:$0xf]
  %v16 = vld [vmem:[%s1] sm:$0xf]
  %v17 = vld [vmem:[%s1 + $0x4] sm:$0xf]
  %v18 = vld [vmem:[%s1 + $0x8] sm:$0xf]
  %v19 = vld [vmem:[%s1 + $0xc] sm:$0xf]
  %v20 = vld [vmem:[%s1 + $0x10] sm:$0xf]
  %v21 = vld [vmem:[%s1 + $0x14] sm:$0xf]
  %v22 = vld [vmem:[%s2] sm:$0xff]
  %24 = vset.pattern.permute.xlu0 0
  %25 = vperm.xlu0 %24, %v22
  %v26 = vpop.permute.xlu0 %25
  %v34 = vunpack.c.l.b16 %v16
  %v35 = vunpack.c.l.b16 %v17
  %v36 = vunpack.c.l.b16 %v18
  %v37 = vunpack.c.l.b16 %v19
  %v38 = vunpack.c.l.b16 %v20
  %v39 = vunpack.c.l.b16 %v21
  %v40 = vpack.c.b16 %v35, %v34
  %v41 = vpack.c.b16 %v37, %v36
  %v42 = vpack.c.b16 %v39, %v38
  %vm46 = vcmask 392192
  %v48 = vsel %vm46, %v15, 0
  %50 = vmatpush.bf16.msra.mxu0 0
  %51 = vmatpush.bf16.msra.mxu0 0
  %52 = vmatpush.bf16.msra.mxu0 0
  %53 = vmatpush.bf16.msra.mxu0 0
  %54 = vmatpush.bf16.msra.mxu0 0
  %55 = vmatpush.bf16.msra.mxu0 %v42
  %56 = vmatpush.bf16.msra.mxu0 %v41
  %57 = vmatpush.bf16.msra.mxu0 %v40
  %58 = vmatmul.bf16.gmra.mxu0 %v48
  %v59 = vpop.f32.mrf.mxu0
  %v60 = vadd.f32 %v26, %v59
  %v61 = vpop.f32.mrf.mxu0
  %62 = vdwg.mxu0
  %63 = vst [vmem:[%s3] sm:$0xff] %v60
  // Predicated region
  $region14: #{discriminator_forward.26} parent=0 // pred_check
    _
  $region15: #{discriminator_forward.26} parent=0 // pred_check_branch
    %65 = sbr.rel (0) target = $region17
  $region16: #{discriminator_forward.26} parent=0 // pred_region
    _
  $region17: #{discriminator_forward.26} parent=0 // pred_fallthru
    _
  // Predicated region
  $region18: #{discriminator_forward.26} parent=0 // pred_check
    _
  $region19: #{discriminator_forward.26} parent=0 // pred_check_branch
    %67 = sbr.rel (0) target = $region21
  $region20: #{discriminator_forward.26} parent=0 // pred_region
    _
  $region21: #{discriminator_forward.26} parent=0 // pred_fallthru
    _

// kernel: discriminator_forward.32
$region0: #{discriminator_forward.32}
  #allocation0 [shape = 'u32[]', space=smem, size = 0x4, offset = 0x4, fixed_abs, tag = 'smem constant byte address 0x4 - core index']
  #allocation1 [shape = 'u32[72,128]{1,0:T(1,128)}', space=vmem, size = 0x9000, scoped, tag = 'internal scratch']
  %s0 = inlined_call_operand.vmem [shape: bf16[8,8], index: 0, kind: input, shape index: {}]
  %s1 = inlined_call_operand.vmem [shape: bf16[8,512], index: 1, kind: input, shape index: {}]
  %s2 = inlined_call_operand.vmem [shape: f32[8,1], index: 2, kind: input, shape index: {}]
  %s3 = inlined_call_operand.vmem [shape: f32[8,512], index: 3, kind: output, shape index: {}]
  %s4 = sld [smem:[#allocation0]]
  $region45: #{discriminator_forward.32} parent=0
    _
  %s6 = ssub.s32 1, %s4
  %s7 = scalar_select 0, %s6, %s4
  loop: start=0, step=1, limit=4
  $region2: #{discriminator_forward.32} parent=0 // loop_pre_header
    _
  $region3: #{discriminator_forward.32} parent=0 // loop_header
    %s9 = sphi 0, %s13
    %p10 = scmp.ge.s32.totalorder %s9, 4
    %s17 = sphi 0, %s17
    %s19 = sphi 0, %s17
    %s20 = sphi 0, %s19
    %s34 = sphi 0, %s20
    %s40 = sphi 0, %s42
    %s43 = sphi 0, %s40
    %s44 = sphi 0, %s43
    %s60 = sphi 0, %s44
    %s64 = sphi 0, %s64
    %s66 = sphi 0, %s64
    %s67 = sphi 0, %s66
    %s81 = sphi 0, %s67
    %s87 = sphi 0, %s89
    %s90 = sphi 0, %s87
    %s91 = sphi 0, %s90
    %s107 = sphi 0, %s91
  $region4: #{discriminator_forward.32} parent=0 // loop_header_branch
    %12 = sbr.rel (%p10) target = $region8
  $region5: #{discriminator_forward.32} parent=0 // loop_body
    %s14 = ssub.s32 %s9, 1
    %s15 = ssub.s32 %s9, 2
    %s16 = sadd.s32 %s9, 1
    %s18 = sadd.s32 %s17, 1
    %p21 = scmp.eq.s32.totalorder %s9, 1
    %p22 = scmp.ne.s32.totalorder %s17, %s19
    %p23 = scmp.eq.s32.totalorder %s9, 0
    %p24 = por %p22, %p23
    %p25 = scmp.ne.s32.totalorder %s17, %s19
    %p26 = scmp.eq.s32.totalorder %s14, 1
    %p27 = por %p25, %p26
    %p28 = scmp.ne.s32.totalorder %s19, %s20
    %p29 = scmp.eq.s32.totalorder %s14, 0
    %p30 = por %p28, %p29
    %p31 = scmp.ne.s32.totalorder %s19, %s20
    %p32 = scmp.eq.s32.totalorder %s15, 1
    %p33 = por %p31, %p32
    %p35 = scmp.ne.s32.totalorder %s20, %s34
    %p36 = scmp.eq.s32.totalorder %s15, 0
    %p37 = por %p35, %p36
    %s38 = ssub.s32 %s9, %s16
    %p39 = scmp.eq.s32.totalorder %s38, 0
    %s41 = sadd.s32 %s40, 1
    %s42 = scalar_select %p39, %s40, %s41
    %p45 = pneg %p39
    %p46 = scmp.eq.s32.totalorder %s9, 1
    %p47 = por %p45, %p46
    %p48 = scmp.ne.s32.totalorder %s40, %s43
    %p49 = scmp.eq.s32.totalorder %s9, 0
    %p50 = por %p48, %p49
    %p51 = scmp.ne.s32.totalorder %s40, %s43
    %p52 = scmp.eq.s32.totalorder %s14, 1
    %p53 = por %p51, %p52
    %p54 = scmp.ne.s32.totalorder %s43, %s44
    %p55 = scmp.eq.s32.totalorder %s14, 0
    %p56 = por %p54, %p55
    %p57 = scmp.ne.s32.totalorder %s43, %s44
    %p58 = scmp.eq.s32.totalorder %s15, 1
    %p59 = por %p57, %p58
    %p61 = scmp.ne.s32.totalorder %s44, %s60
    %p62 = scmp.eq.s32.totalorder %s15, 0
    %p63 = por %p61, %p62
    %s65 = sadd.s32 %s64, 1
    %p68 = scmp.eq.s32.totalorder %s9, 1
    %p69 = scmp.ne.s32.totalorder %s64, %s66
    %p70 = scmp.eq.s32.totalorder %s9, 0
    %p71 = por %p69, %p70
    %p72 = scmp.ne.s32.totalorder %s64, %s66
    %p73 = scmp.eq.s32.totalorder %s14, 1
    %p74 = por %p72, %p73
    %p75 = scmp.ne.s32.totalorder %s66, %s67
    %p76 = scmp.eq.s32.totalorder %s14, 0
    %p77 = por %p75, %p76
    %p78 = scmp.ne.s32.totalorder %s66, %s67
    %p79 = scmp.eq.s32.totalorder %s15, 1
    %p80 = por %p78, %p79
    %p82 = scmp.ne.s32.totalorder %s67, %s81
    %p83 = scmp.eq.s32.totalorder %s15, 0
    %p84 = por %p82, %p83
    %s85 = ssub.s32 %s9, %s16
    %p86 = scmp.eq.s32.totalorder %s85, 0
    %s88 = sadd.s32 %s87, 1
    %s89 = scalar_select %p86, %s87, %s88
    %p92 = pneg %p86
    %p93 = scmp.eq.s32.totalorder %s9, 1
    %p94 = por %p92, %p93
    %p95 = scmp.ne.s32.totalorder %s87, %s90
    %p96 = scmp.eq.s32.totalorder %s9, 0
    %p97 = por %p95, %p96
    %p98 = scmp.ne.s32.totalorder %s87, %s90
    %p99 = scmp.eq.s32.totalorder %s14, 1
    %p100 = por %p98, %p99
    %p101 = scmp.ne.s32.totalorder %s90, %s91
    %p102 = scmp.eq.s32.totalorder %s14, 0
    %p103 = por %p101, %p102
    %p104 = scmp.ne.s32.totalorder %s90, %s91
    %p105 = scmp.eq.s32.totalorder %s15, 1
    %p106 = por %p104, %p105
    %p108 = scmp.ne.s32.totalorder %s91, %s107
    %p109 = scmp.eq.s32.totalorder %s15, 0
    %p110 = por %p108, %p109
    %p111 = scmp.le.s32.totalorder 1, %s9
    %p112 = scmp.lt.s32.totalorder %s9, 3
    %p113 = pnand %p111, %p112
    %p114 = pneg %p113
    // Predicated region
    $region9: #{discriminator_forward.32} parent=5 // pred_check
      _
    $region10: #{discriminator_forward.32} parent=5 // pred_check_branch
      %116 = sbr.rel (%p113) target = $region12
    $region11: #{discriminator_forward.32} parent=5 // pred_region
      %s117 = ssub.s32 %s9, 1
      // Predicated region
      $region13: #{discriminator_forward.32} parent=11 // pred_check
        %p118 = pneg %p30
      $region14: #{discriminator_forward.32} parent=11 // pred_check_branch
        %120 = sbr.rel (%p118) target = $region16
      $region15: #{discriminator_forward.32} parent=11 // pred_region
        _
      $region16: #{discriminator_forward.32} parent=11 // pred_fallthru
        _
      // Predicated region
      $region17: #{discriminator_forward.32} parent=11 // pred_check
        %p121 = pneg %p77
      $region18: #{discriminator_forward.32} parent=11 // pred_check_branch
        %123 = sbr.rel (%p121) target = $region20
      $region19: #{discriminator_forward.32} parent=11 // pred_region
        _
      $region20: #{discriminator_forward.32} parent=11 // pred_fallthru
        _
    $region12: #{discriminator_forward.32} parent=5 // pred_fallthru
      _
    %p124 = scmp.lt.s32.totalorder %s9, 2
    // Predicated region
    $region21: #{discriminator_forward.32} parent=5 // pred_check
      %p125 = pneg %p124
    $region22: #{discriminator_forward.32} parent=5 // pred_check_branch
      %127 = sbr.rel (%p125) target = $region24
    $region23: #{discriminator_forward.32} parent=5 // pred_region
      // Predicated region
      $region25: #{discriminator_forward.32} parent=23 // pred_check
        %p128 = pneg %p50
      $region26: #{discriminator_forward.32} parent=23 // pred_check_branch
        %130 = sbr.rel (%p128) target = $region28
      $region27: #{discriminator_forward.32} parent=23 // pred_region
        %s131 = smul.u32 2, %s9
        %p132 = scmp.lt.s32.totalorder %s131, 3
        %s133 = scalar_select %p132, %s131, 3
        %s134 = smul.addr %s133, 4
        %s135 = scalar_lea.vmem %s1, %s134
        %s136 = smul.u32 2, %s9
      $region28: #{discriminator_forward.32} parent=23 // pred_fallthru
        _
    $region24: #{discriminator_forward.32} parent=5 // pred_fallthru
      _
    %p137 = scmp.le.s32.totalorder 1, %s9
    %p138 = scmp.lt.s32.totalorder %s9, 3
    %p139 = pnand %p137, %p138
    %p140 = pneg %p139
    // Predicated region
    $region29: #{discriminator_forward.32} parent=5 // pred_check
      _
    $region30: #{discriminator_forward.32} parent=5 // pred_check_branch
      %142 = sbr.rel (%p139) target = $region32
    $region31: #{discriminator_forward.32} parent=5 // pred_region
      %s143 = ssub.s32 %s9, 1
      %p144 = pneg %p30
      %p145 = pneg %p27
      %s146 = smul.u32 2, %s14
      %p147 = scmp.lt.s32.totalorder %s146, 3
      %s148 = scalar_select %p147, %s146, 3
      %s149 = smul.addr %s148, 4
      %s150 = scalar_lea.vmem %s1, %s149
      %p151 = pneg %p56
      %p152 = pneg %p53
      %p153 = pneg %p77
      %p154 = pneg %p74
      %p155 = pneg %p103
      %p156 = pneg %p100
      %s157 = smul.u32 2, %s14
      %p158 = scmp.lt.s32.totalorder %s157, 3
      %s159 = scalar_select %p158, %s157, 3
      %s160 = smul.addr %s159, 8
      %s161 = scalar_lea.vmem %s3, %s160
      %s162 = smul.u32 2, %s14
      %p163 = scmp.lt.s32.totalorder %s162, 3
      %s164 = scalar_select %p163, %s162, 3
      %s165 = smul.addr %s164, 4
      %s166 = scalar_lea.vmem %s1, %s165
      %s167 = smul.u32 2, %s14
      %s168 = smul.u32 2, %s14
      %p169 = scmp.lt.s32.totalorder %s168, 3
      %s170 = scalar_select %p169, %s168, 3
      %s171 = smul.addr %s170, 8
      %s172 = scalar_lea.vmem %s3, %s171
      %s173 = smul.u32 2, %s14
      %v175 = vld [vmem:[%s0] sm:$0xf]
      %v176 = vld [vmem:[%s166] sm:$0xff]
      %v177 = vld [vmem:[%s2] sm:$0xff]
      %179 = vset.pattern.permute.xlu0 0
      %180 = vperm.xlu0 %179, %v177
      %v181 = vpop.permute.xlu0 %180
      %v184 = vunpack.c.l.b16 %v176
      %v185 = vunpack.c.h.b16 %v176
      %v186 = vpack.c.b16 %v184, %v184
      %v187 = vpack.c.b16 %v185, %v185
      %vm188 = vcmask 64512
      %v190 = vsel %vm188, %v175, 0
      %vm192 = vcmask 1043456
      %v194 = vsel %vm192, %v186, 0
      %v197 = vsel %vm192, %v187, 0
      %199 = vmatpush.bf16.msra.mxu0 0
      %200 = vmatpush.bf16.msra.mxu0 0
      %201 = vmatpush.bf16.msra.mxu0 0
      %202 = vmatpush.bf16.msra.mxu0 0
      %203 = vmatpush.bf16.msra.mxu0 0
      %204 = vmatpush.bf16.msra.mxu0 0
      %205 = vmatpush.bf16.msra.mxu0 0
      %206 = vmatpush.bf16.msra.mxu0 %v194
      %207 = vmatmul.bf16.gmra.mxu0 %v190
      %v208 = vpop.f32.mrf.mxu0
      %v209 = vadd.f32 %v181, %v208
      %v210 = vpop.f32.mrf.mxu0
      %211 = vdwg.mxu0
      %212 = vmatpush.bf16.msra.mxu0 0
      %213 = vmatpush.bf16.msra.mxu0 0
      %214 = vmatpush.bf16.msra.mxu0 0
      %215 = vmatpush.bf16.msra.mxu0 0
      %216 = vmatpush.bf16.msra.mxu0 0
      %217 = vmatpush.bf16.msra.mxu0 0
      %218 = vmatpush.bf16.msra.mxu0 0
      %219 = vmatpush.bf16.msra.mxu0 %v197
      %220 = vmatmul.bf16.gmra.mxu0 %v190
      %v221 = vpop.f32.mrf.mxu0
      %v222 = vadd.f32 %v181, %v221
      %v223 = vpop.f32.mrf.mxu0
      %224 = vdwg.mxu0
      %vm225 = vcmp.gt.f32.partialorder %v209, 0.0
      %vm226 = vcmp.gt.f32.partialorder %v222, 0.0
      %v227 = vmul.f32 %v209, 0.1
      %v228 = vmul.f32 %v222, 0.1
      %v229 = vsel %vm225, %v209, %v227
      %v230 = vsel %vm226, %v222, %v228
      %231 = vst [vmem:[%s172] sm:$0xff] %v229
      %232 = vst [vmem:[%s172 + $0x8] sm:$0xff] %v230
      %s233 = smul.u32 2, %s14
      %p234 = scmp.lt.s32.totalorder %s233, 3
      %s235 = scalar_select %p234, %s233, 3
      %s236 = smul.addr %s235, 8
      %s237 = scalar_lea.vmem %s3, %s236
      // Predicated region
      $region33: #{discriminator_forward.32} parent=31 // pred_check
        %p238 = pneg %p100
      $region34: #{discriminator_forward.32} parent=31 // pred_check_branch
        %240 = sbr.rel (%p238) target = $region36
      $region35: #{discriminator_forward.32} parent=31 // pred_region
        %s241 = smul.u32 2, %s14
      $region36: #{discriminator_forward.32} parent=31 // pred_fallthru
        _
    $region32: #{discriminator_forward.32} parent=5 // pred_fallthru
      _
    %p242 = scmp.le.s32.totalorder 2, %s9
    // Predicated region
    $region37: #{discriminator_forward.32} parent=5 // pred_check
      %p243 = pneg %p242
    $region38: #{discriminator_forward.32} parent=5 // pred_check_branch
      %245 = sbr.rel (%p243) target = $region40
    $region39: #{discriminator_forward.32} parent=5 // pred_region
      %s246 = ssub.s32 %s9, 2
      // Predicated region
      $region41: #{discriminator_forward.32} parent=39 // pred_check
        %p247 = pneg %p106
      $region42: #{discriminator_forward.32} parent=39 // pred_check_branch
        %249 = sbr.rel (%p247) target = $region44
      $region43: #{discriminator_forward.32} parent=39 // pred_region
        %s250 = smul.u32 2, %s15
        %p251 = scmp.lt.s32.totalorder %s250, 3
        %s252 = scalar_select %p251, %s250, 3
        %s253 = smul.addr %s252, 8
        %s254 = scalar_lea.vmem %s3, %s253
      $region44: #{discriminator_forward.32} parent=39 // pred_fallthru
        _
    $region40: #{discriminator_forward.32} parent=5 // pred_fallthru
      _
  $region6: #{discriminator_forward.32} parent=0 // loop_footer
    %s13 = sadd.s32 1, %s9
  $region7: #{discriminator_forward.32} parent=0 // loop_footer_branch
    %8 = sbr.rel target = $region3
  $region8: #{discriminator_forward.32} parent=0 // loop_exit
    _

// kernel: discriminator_forward.33
$region0: #{discriminator_forward.33}
  #allocation0 [shape = 'u32[]', space=smem, size = 0x4, offset = 0x4, fixed_abs, tag = 'smem constant byte address 0x4 - core index']
  #allocation1 [shape = 'u32[72,128]{1,0:T(1,128)}', space=vmem, size = 0x9000, scoped, tag = 'internal scratch']
  %s0 = inlined_call_operand.vmem [shape: bf16[16,56], index: 0, kind: input, shape index: {}]
  %s1 = inlined_call_operand.vmem [shape: bf16[56,256], index: 1, kind: input, shape index: {}]
  %s2 = inlined_call_operand.vmem [shape: f32[16,1], index: 2, kind: input, shape index: {}]
  %s3 = inlined_call_operand.vmem [shape: f32[16,256], index: 3, kind: output, shape index: {}]
  %s4 = sld [smem:[#allocation0]]
  $region120: #{discriminator_forward.33} parent=0
    _
  %s6 = ssub.s32 1, %s4
  %s7 = scalar_select 0, %s6, %s4
  $region1: #{discriminator_forward.33} parent=0
    #allocation2 [shape = 'u8[28672]{0}', space=vmem, size = 0x7000, scoped, tag = 'input window, operand 1']
    #allocation3 [shape = 'u8[16384]{0}', space=vmem, size = 0x4000, scoped, tag = 'output window, operand 0']
    loop: start=0, step=1, limit=4
    $region2: #{discriminator_forward.33} parent=1 // loop_pre_header
      _
    $region3: #{discriminator_forward.33} parent=1 // loop_header
      %s9 = sphi 0, %s13
      %p10 = scmp.ge.s32.totalorder %s9, 4
      %s17 = sphi 0, %s17
      %s19 = sphi 0, %s17
      %s20 = sphi 0, %s19
      %s34 = sphi 0, %s20
      %s40 = sphi 0, %s42
      %s43 = sphi 0, %s40
      %s44 = sphi 0, %s43
      %s60 = sphi 0, %s44
      %s64 = sphi 0, %s64
      %s66 = sphi 0, %s64
      %s67 = sphi 0, %s66
      %s81 = sphi 0, %s67
      %s87 = sphi 0, %s89
      %s90 = sphi 0, %s87
      %s91 = sphi 0, %s90
      %s107 = sphi 0, %s91
    $region4: #{discriminator_forward.33} parent=1 // loop_header_branch
      %12 = sbr.rel (%p10) target = $region8
    $region5: #{discriminator_forward.33} parent=1 // loop_body
      %s14 = ssub.s32 %s9, 1
      %s15 = ssub.s32 %s9, 2
      %s16 = sadd.s32 %s9, 1
      %s18 = sadd.s32 %s17, 1
      %p21 = scmp.eq.s32.totalorder %s9, 1
      %p22 = scmp.ne.s32.totalorder %s17, %s19
      %p23 = scmp.eq.s32.totalorder %s9, 0
      %p24 = por %p22, %p23
      %p25 = scmp.ne.s32.totalorder %s17, %s19
      %p26 = scmp.eq.s32.totalorder %s14, 1
      %p27 = por %p25, %p26
      %p28 = scmp.ne.s32.totalorder %s19, %s20
      %p29 = scmp.eq.s32.totalorder %s14, 0
      %p30 = por %p28, %p29
      %p31 = scmp.ne.s32.totalorder %s19, %s20
      %p32 = scmp.eq.s32.totalorder %s15, 1
      %p33 = por %p31, %p32
      %p35 = scmp.ne.s32.totalorder %s20, %s34
      %p36 = scmp.eq.s32.totalorder %s15, 0
      %p37 = por %p35, %p36
      %s38 = ssub.s32 %s9, %s16
      %p39 = scmp.eq.s32.totalorder %s38, 0
      %s41 = sadd.s32 %s40, 1
      %s42 = scalar_select %p39, %s40, %s41
      %p45 = pneg %p39
      %p46 = scmp.eq.s32.totalorder %s9, 1
      %p47 = por %p45, %p46
      %p48 = scmp.ne.s32.totalorder %s40, %s43
      %p49 = scmp.eq.s32.totalorder %s9, 0
      %p50 = por %p48, %p49
      %p51 = scmp.ne.s32.totalorder %s40, %s43
      %p52 = scmp.eq.s32.totalorder %s14, 1
      %p53 = por %p51, %p52
      %p54 = scmp.ne.s32.totalorder %s43, %s44
      %p55 = scmp.eq.s32.totalorder %s14, 0
      %p56 = por %p54, %p55
      %p57 = scmp.ne.s32.totalorder %s43, %s44
      %p58 = scmp.eq.s32.totalorder %s15, 1
      %p59 = por %p57, %p58
      %p61 = scmp.ne.s32.totalorder %s44, %s60
      %p62 = scmp.eq.s32.totalorder %s15, 0
      %p63 = por %p61, %p62
      %s65 = sadd.s32 %s64, 1
      %p68 = scmp.eq.s32.totalorder %s9, 1
      %p69 = scmp.ne.s32.totalorder %s64, %s66
      %p70 = scmp.eq.s32.totalorder %s9, 0
      %p71 = por %p69, %p70
      %p72 = scmp.ne.s32.totalorder %s64, %s66
      %p73 = scmp.eq.s32.totalorder %s14, 1
      %p74 = por %p72, %p73
      %p75 = scmp.ne.s32.totalorder %s66, %s67
      %p76 = scmp.eq.s32.totalorder %s14, 0
      %p77 = por %p75, %p76
      %p78 = scmp.ne.s32.totalorder %s66, %s67
      %p79 = scmp.eq.s32.totalorder %s15, 1
      %p80 = por %p78, %p79
      %p82 = scmp.ne.s32.totalorder %s67, %s81
      %p83 = scmp.eq.s32.totalorder %s15, 0
      %p84 = por %p82, %p83
      %s85 = ssub.s32 %s9, %s16
      %p86 = scmp.eq.s32.totalorder %s85, 0
      %s88 = sadd.s32 %s87, 1
      %s89 = scalar_select %p86, %s87, %s88
      %p92 = pneg %p86
      %p93 = scmp.eq.s32.totalorder %s9, 1
      %p94 = por %p92, %p93
      %p95 = scmp.ne.s32.totalorder %s87, %s90
      %p96 = scmp.eq.s32.totalorder %s9, 0
      %p97 = por %p95, %p96
      %p98 = scmp.ne.s32.totalorder %s87, %s90
      %p99 = scmp.eq.s32.totalorder %s14, 1
      %p100 = por %p98, %p99
      %p101 = scmp.ne.s32.totalorder %s90, %s91
      %p102 = scmp.eq.s32.totalorder %s14, 0
      %p103 = por %p101, %p102
      %p104 = scmp.ne.s32.totalorder %s90, %s91
      %p105 = scmp.eq.s32.totalorder %s15, 1
      %p106 = por %p104, %p105
      %p108 = scmp.ne.s32.totalorder %s91, %s107
      %p109 = scmp.eq.s32.totalorder %s15, 0
      %p110 = por %p108, %p109
      %p111 = scmp.le.s32.totalorder 1, %s9
      %p112 = scmp.lt.s32.totalorder %s9, 3
      %p113 = pnand %p111, %p112
      %p114 = pneg %p113
      // Predicated region
      $region9: #{discriminator_forward.33} parent=5 // pred_check
        _
      $region10: #{discriminator_forward.33} parent=5 // pred_check_branch
        %116 = sbr.rel (%p113) target = $region12
      $region11: #{discriminator_forward.33} parent=5 // pred_region
        %s117 = ssub.s32 %s9, 1
        // Predicated region
        $region13: #{discriminator_forward.33} parent=11 // pred_check
          %p118 = pneg %p30
        $region14: #{discriminator_forward.33} parent=11 // pred_check_branch
          %120 = sbr.rel (%p118) target = $region16
        $region15: #{discriminator_forward.33} parent=11 // pred_region
          _
        $region16: #{discriminator_forward.33} parent=11 // pred_fallthru
          _
        // Predicated region
        $region17: #{discriminator_forward.33} parent=11 // pred_check
          %p121 = pneg %p77
        $region18: #{discriminator_forward.33} parent=11 // pred_check_branch
          %123 = sbr.rel (%p121) target = $region20
        $region19: #{discriminator_forward.33} parent=11 // pred_region
          _
        $region20: #{discriminator_forward.33} parent=11 // pred_fallthru
          _
      $region12: #{discriminator_forward.33} parent=5 // pred_fallthru
        _
      %p124 = scmp.lt.s32.totalorder %s9, 2
      // Predicated region
      $region21: #{discriminator_forward.33} parent=5 // pred_check
        %p125 = pneg %p124
      $region22: #{discriminator_forward.33} parent=5 // pred_check_branch
        %127 = sbr.rel (%p125) target = $region24
      $region23: #{discriminator_forward.33} parent=5 // pred_region
        // Predicated region
        $region25: #{discriminator_forward.33} parent=23 // pred_check
          %p128 = pneg %p50
        $region26: #{discriminator_forward.33} parent=23 // pred_check_branch
          %130 = sbr.rel (%p128) target = $region28
        $region27: #{discriminator_forward.33} parent=23 // pred_region
          %s131 = sand.u32 %s40, 1
          %s132 = sand.u32 %s40, 1
          %s133 = smul.addr %s132, 28
          %s134 = scalar_lea.vmem [#allocation2], %s133
          %s135 = smul.addr %s9, 4
          %s136 = scalar_lea.vmem %s1, %s135
          // Predicated region
          $region29: #{discriminator_forward.33} parent=27 // pred_check
            _
          $region30: #{discriminator_forward.33} parent=27 // pred_check_branch
            %138 = sbr.rel (0) target = $region32
          $region31: #{discriminator_forward.33} parent=27 // pred_region
            // Predicated region
            $region33: #{discriminator_forward.33} parent=31 // pred_check
              _
            $region34: #{discriminator_forward.33} parent=31 // pred_check_branch
              %140 = sbr.rel target = $region36
            $region35: #{discriminator_forward.33} parent=31 // pred_region
              // Predicated region
              $region48: #{discriminator_forward.33} parent=35 // pred_check
                _
              $region49: #{discriminator_forward.33} parent=35 // pred_check_branch
                %168 = sbr.rel (0) target = $region51
              $region50: #{discriminator_forward.33} parent=35 // pred_region
                loop: start=0, step=1, limit=1
                $region52: #{discriminator_forward.33} parent=50 // loop_pre_header
                  _
                $region53: #{discriminator_forward.33} parent=50 // loop_header
                  %s170 = sphi 0, %s174
                  %p171 = scmp.ge.s32.totalorder %s170, 1
                  %s175 = sphi %s136, %s136
                  %s176 = sphi %s134, %s134
                $region54: #{discriminator_forward.33} parent=50 // loop_header_branch
                  %173 = sbr.rel (%p171) target = $region58
                $region55: #{discriminator_forward.33} parent=50 // loop_body
                  _
                $region56: #{discriminator_forward.33} parent=50 // loop_footer
                  %s174 = sadd.s32 1, %s170
                $region57: #{discriminator_forward.33} parent=50 // loop_footer_branch
                  %169 = sbr.rel target = $region53
                $region58: #{discriminator_forward.33} parent=50 // loop_exit
                  _
                %s178 = ssub.s32 16, 1
                loop: start=0, step=1, limit=1
                $region59: #{discriminator_forward.33} parent=50 // loop_pre_header
                  _
                $region60: #{discriminator_forward.33} parent=50 // loop_header
                  %s180 = sphi 0, %s184
                  %p181 = scmp.ge.s32.totalorder %s180, 1
                  %s185 = sphi %s136, %s136
                  %s186 = sphi %s134, %s134
                $region61: #{discriminator_forward.33} parent=50 // loop_header_branch
                  %183 = sbr.rel (%p181) target = $region65
                $region62: #{discriminator_forward.33} parent=50 // loop_body
                  %v187 = vld [vmem:[%s185] sm:%s178]
                  %188 = vst [vmem:[%s186] sm:%s178] %v187
                  %v189 = vld [vmem:[%s185 + $0x8] sm:%s178]
                  %190 = vst [vmem:[%s186 + $0x4] sm:%s178] %v189
                  %v191 = vld [vmem:[%s185 + $0x10] sm:%s178]
                  %192 = vst [vmem:[%s186 + $0x8] sm:%s178] %v191
                  %v193 = vld [vmem:[%s185 + $0x18] sm:%s178]
                  %194 = vst [vmem:[%s186 + $0xc] sm:%s178] %v193
                  %v195 = vld [vmem:[%s185 + $0x20] sm:%s178]
                  %196 = vst [vmem:[%s186 + $0x10] sm:%s178] %v195
                  %v197 = vld [vmem:[%s185 + $0x28] sm:%s178]
                  %198 = vst [vmem:[%s186 + $0x14] sm:%s178] %v197
                  %v199 = vld [vmem:[%s185 + $0x30] sm:%s178]
                  %200 = vst [vmem:[%s186 + $0x18] sm:%s178] %v199
                $region63: #{discriminator_forward.33} parent=50 // loop_footer
                  %s184 = sadd.s32 1, %s180
                $region64: #{discriminator_forward.33} parent=50 // loop_footer_branch
                  %179 = sbr.rel target = $region60
                $region65: #{discriminator_forward.33} parent=50 // loop_exit
                  _
              $region51: #{discriminator_forward.33} parent=35 // pred_fallthru
                _
            $region36: #{discriminator_forward.33} parent=31 // pred_fallthru
              _
            // Predicated region
            $region37: #{discriminator_forward.33} parent=31 // pred_check
              _
            $region38: #{discriminator_forward.33} parent=31 // pred_check_branch
              %142 = sbr.rel (0) target = $region40
            $region39: #{discriminator_forward.33} parent=31 // pred_region
              %s144 = ssub.s32 16, 1
              loop: start=0, step=1, limit=1
              $region41: #{discriminator_forward.33} parent=39 // loop_pre_header
                _
              $region42: #{discriminator_forward.33} parent=39 // loop_header
                %s146 = sphi 0, %s150
                %p147 = scmp.ge.s32.totalorder %s146, 1
                %s151 = sphi %s136, %s136
                %s152 = sphi %s134, %s134
              $region43: #{discriminator_forward.33} parent=39 // loop_header_branch
                %149 = sbr.rel (%p147) target = $region47
              $region44: #{discriminator_forward.33} parent=39 // loop_body
                %v153 = vld [vmem:[%s151] sm:%s144]
                %154 = vst [vmem:[%s152] sm:%s144] %v153
                %v155 = vld [vmem:[%s151 + $0x8] sm:%s144]
                %156 = vst [vmem:[%s152 + $0x4] sm:%s144] %v155
                %v157 = vld [vmem:[%s151 + $0x10] sm:%s144]
                %158 = vst [vmem:[%s152 + $0x8] sm:%s144] %v157
                %v159 = vld [vmem:[%s151 + $0x18] sm:%s144]
                %160 = vst [vmem:[%s152 + $0xc] sm:%s144] %v159
                %v161 = vld [vmem:[%s151 + $0x20] sm:%s144]
                %162 = vst [vmem:[%s152 + $0x10] sm:%s144] %v161
                %v163 = vld [vmem:[%s151 + $0x28] sm:%s144]
                %164 = vst [vmem:[%s152 + $0x14] sm:%s144] %v163
                %v165 = vld [vmem:[%s151 + $0x30] sm:%s144]
                %166 = vst [vmem:[%s152 + $0x18] sm:%s144] %v165
              $region45: #{discriminator_forward.33} parent=39 // loop_footer
                %s150 = sadd.s32 1, %s146
              $region46: #{discriminator_forward.33} parent=39 // loop_footer_branch
                %145 = sbr.rel target = $region42
              $region47: #{discriminator_forward.33} parent=39 // loop_exit
                _
            $region40: #{discriminator_forward.33} parent=31 // pred_fallthru
              _
          $region32: #{discriminator_forward.33} parent=27 // pred_fallthru
            _
          %201 = vnop
        $region28: #{discriminator_forward.33} parent=23 // pred_fallthru
          _
      $region24: #{discriminator_forward.33} parent=5 // pred_fallthru
        _
      %p202 = scmp.le.s32.totalorder 1, %s9
      %p203 = scmp.lt.s32.totalorder %s9, 3
      %p204 = pnand %p202, %p203
      %p205 = pneg %p204
      // Predicated region
      $region66: #{discriminator_forward.33} parent=5 // pred_check
        _
      $region67: #{discriminator_forward.33} parent=5 // pred_check_branch
        %207 = sbr.rel (%p204) target = $region69
      $region68: #{discriminator_forward.33} parent=5 // pred_region
        %s208 = ssub.s32 %s9, 1
        %s209 = sand.u32 %s43, 1
        %s210 = sand.u32 %s43, 1
        %s211 = smul.addr %s210, 28
        %s212 = scalar_lea.vmem [#allocation2], %s211
        // Predicated region
        $region70: #{discriminator_forward.33} parent=68 // pred_check
          %p213 = pneg %p56
        $region71: #{discriminator_forward.33} parent=68 // pred_check_branch
          %215 = sbr.rel (%p213) target = $region73
        $region72: #{discriminator_forward.33} parent=68 // pred_region
          _
        $region73: #{discriminator_forward.33} parent=68 // pred_fallthru
          _
        %p216 = pneg %p30
        %p217 = pneg %p27
        %s218 = sand.u32 %s43, 1
        %s219 = sand.u32 %s43, 1
        %s220 = smul.addr %s219, 28
        %s221 = scalar_lea.vmem [#allocation2], %s220
        %p222 = pneg %p56
        %p223 = pneg %p53
        %p224 = pneg %p77
        %p225 = pneg %p74
        %p226 = pneg %p103
        %p227 = pneg %p100
        %s228 = sand.u32 %s90, 1
        %s229 = sand.u32 %s90, 1
        %s230 = smul.addr %s229, 16
        %s231 = scalar_lea.vmem [#allocation3], %s230
        %v233 = vld [vmem:[%s0] sm:$0xf]
        %v234 = vld [vmem:[%s0 + $0x4] sm:$0xf]
        %v235 = vld [vmem:[%s212] sm:$0xf]
        %v236 = vld [vmem:[%s212 + $0x4] sm:$0xf]
        %v237 = vld [vmem:[%s212 + $0x8] sm:$0xf]
        %v238 = vld [vmem:[%s212 + $0xc] sm:$0xf]
        %v239 = vld [vmem:[%s212 + $0x10] sm:$0xf]
        %v240 = vld [vmem:[%s212 + $0x14] sm:$0xf]
        %v241 = vld [vmem:[%s212 + $0x18] sm:$0xf]
        %v242 = vld [vmem:[%s2] sm:$0xff]
        %v243 = vld [vmem:[%s2 + $0x8] sm:$0xff]
        %245 = vset.pattern.permute.xlu0 0
        %246 = vperm.xlu0 %245, %v242
        %v247 = vpop.permute.xlu0 %246
        %250 = vset.pattern.permute.xlu0 0
        %251 = vperm.xlu0 %250, %v243
        %v252 = vpop.permute.xlu0 %251
        %v256 = vunpack.c.l.b16 %v233
        %v257 = vunpack.c.l.b16 %v234
        %v258 = vpack.c.b16 %v257, %v256
        %v266 = vunpack.c.l.b16 %v235
        %v267 = vunpack.c.l.b16 %v236
        %v268 = vunpack.c.l.b16 %v237
        %v269 = vunpack.c.l.b16 %v238
        %v270 = vunpack.c.l.b16 %v239
        %v271 = vunpack.c.l.b16 %v240
        %v272 = vunpack.c.l.b16 %v241
        %v273 = vpack.c.b16 %v267, %v266
        %v274 = vpack.c.b16 %v269, %v268
        %v275 = vpack.c.b16 %v271, %v270
        %v276 = vpack.c.b16 %v272, %v272
        %vm280 = vcmask 457728
        %v282 = vsel %vm280, %v258, 0
        %vm284 = vcmask 1043456
        %v286 = vsel %vm284, %v276, 0
        %288 = vmatpush.bf16.msra.mxu0 0
        %289 = vmatpush.bf16.msra.mxu0 0
        %290 = vmatpush.bf16.msra.mxu0 0
        %291 = vmatpush.bf16.msra.mxu0 0
        %292 = vmatpush.bf16.msra.mxu0 %v286
        %293 = vmatpush.bf16.msra.mxu0 %v275
        %294 = vmatpush.bf16.msra.mxu0 %v274
        %295 = vmatpush.bf16.msra.mxu0 %v273
        %296 = vmatmul.bf16.gmra.mxu0 %v282
        %v297 = vpop.f32.mrf.mxu0
        %v298 = vadd.f32 %v247, %v297
        %v299 = vpop.f32.mrf.mxu0
        %v300 = vadd.f32 %v252, %v299
        %301 = vdwg.mxu0
        %vm302 = vcmp.gt.f32.partialorder %v298, 0.0
        %vm303 = vcmp.gt.f32.partialorder %v300, 0.0
        %v304 = vmul.f32 %v298, 0.1
        %v305 = vmul.f32 %v300, 0.1
        %v306 = vsel %vm302, %v298, %v304
        %v307 = vsel %vm303, %v300, %v305
        %308 = vst [vmem:[%s231] sm:$0xff] %v306
        %309 = vst [vmem:[%s231 + $0x8] sm:$0xff] %v307
        %s310 = sand.u32 %s90, 1
        %s311 = sand.u32 %s90, 1
        %s312 = smul.addr %s311, 16
        %s313 = scalar_lea.vmem [#allocation3], %s312
        // Predicated region
        $region74: #{discriminator_forward.33} parent=68 // pred_check
          %p314 = pneg %p100
        $region75: #{discriminator_forward.33} parent=68 // pred_check_branch
          %316 = sbr.rel (%p314) target = $region77
        $region76: #{discriminator_forward.33} parent=68 // pred_region
          %s317 = smul.addr %s14, 8
          %s318 = scalar_lea.vmem %s3, %s317
          // Predicated region
          $region78: #{discriminator_forward.33} parent=76 // pred_check
            _
          $region79: #{discriminator_forward.33} parent=76 // pred_check_branch
            %320 = sbr.rel (0) target = $region81
          $region80: #{discriminator_forward.33} parent=76 // pred_region
            // Predicated region
            $region82: #{discriminator_forward.33} parent=80 // pred_check
              _
            $region83: #{discriminator_forward.33} parent=80 // pred_check_branch
              %322 = sbr.rel (0) target = $region85
            $region84: #{discriminator_forward.33} parent=80 // pred_region
              // Predicated region
              $region97: #{discriminator_forward.33} parent=84 // pred_check
                _
              $region98: #{discriminator_forward.33} parent=84 // pred_check_branch
                %340 = sbr.rel (0) target = $region100
              $region99: #{discriminator_forward.33} parent=84 // pred_region
                loop: start=0, step=1, limit=1
                $region101: #{discriminator_forward.33} parent=99 // loop_pre_header
                  _
                $region102: #{discriminator_forward.33} parent=99 // loop_header
                  %s342 = sphi 0, %s346
                  %p343 = scmp.ge.s32.totalorder %s342, 1
                  %s347 = sphi %s313, %s313
                  %s348 = sphi %s318, %s318
                $region103: #{discriminator_forward.33} parent=99 // loop_header_branch
                  %345 = sbr.rel (%p343) target = $region107
                $region104: #{discriminator_forward.33} parent=99 // loop_body
                  %v349 = vld [vmem:[%s347] sm:$0xff]
                  %350 = vst [vmem:[%s348] sm:$0xff] %v349
                  %v351 = vld [vmem:[%s347 + $0x8] sm:$0xff]
                  %352 = vst [vmem:[%s348 + $0x10] sm:$0xff] %v351
                $region105: #{discriminator_forward.33} parent=99 // loop_footer
                  %s346 = sadd.s32 1, %s342
                $region106: #{discriminator_forward.33} parent=99 // loop_footer_branch
                  %341 = sbr.rel target = $region102
                $region107: #{discriminator_forward.33} parent=99 // loop_exit
                  _
              $region100: #{discriminator_forward.33} parent=84 // pred_fallthru
                _
              // Predicated region
              $region108: #{discriminator_forward.33} parent=84 // pred_check
                _
              $region109: #{discriminator_forward.33} parent=84 // pred_check_branch
                %354 = sbr.rel target = $region111
              $region110: #{discriminator_forward.33} parent=84 // pred_region
                _
              $region111: #{discriminator_forward.33} parent=84 // pred_fallthru
                _
            $region85: #{discriminator_forward.33} parent=80 // pred_fallthru
              _
            // Predicated region
            $region86: #{discriminator_forward.33} parent=80 // pred_check
              _
            $region87: #{discriminator_forward.33} parent=80 // pred_check_branch
              %324 = sbr.rel target = $region89
            $region88: #{discriminator_forward.33} parent=80 // pred_region
              %s326 = ssub.s32 256, 1
              loop: start=0, step=1, limit=1
              $region90: #{discriminator_forward.33} parent=88 // loop_pre_header
                _
              $region91: #{discriminator_forward.33} parent=88 // loop_header
                %s328 = sphi 0, %s332
                %p329 = scmp.ge.s32.totalorder %s328, 1
                %s333 = sphi %s313, %s313
                %s334 = sphi %s318, %s318
              $region92: #{discriminator_forward.33} parent=88 // loop_header_branch
                %331 = sbr.rel (%p329) target = $region96
              $region93: #{discriminator_forward.33} parent=88 // loop_body
                %v335 = vld [vmem:[%s333] sm:%s326]
                %336 = vst [vmem:[%s334] sm:%s326] %v335
                %v337 = vld [vmem:[%s333 + $0x8] sm:%s326]
                %338 = vst [vmem:[%s334 + $0x10] sm:%s326] %v337
              $region94: #{discriminator_forward.33} parent=88 // loop_footer
                %s332 = sadd.s32 1, %s328
              $region95: #{discriminator_forward.33} parent=88 // loop_footer_branch
                %327 = sbr.rel target = $region91
              $region96: #{discriminator_forward.33} parent=88 // loop_exit
                _
            $region89: #{discriminator_forward.33} parent=80 // pred_fallthru
              _
          $region81: #{discriminator_forward.33} parent=76 // pred_fallthru
            _
          %355 = vnop
        $region77: #{discriminator_forward.33} parent=68 // pred_fallthru
          _
      $region69: #{discriminator_forward.33} parent=5 // pred_fallthru
        _
      %p356 = scmp.le.s32.totalorder 2, %s9
      // Predicated region
      $region112: #{discriminator_forward.33} parent=5 // pred_check
        %p357 = pneg %p356
      $region113: #{discriminator_forward.33} parent=5 // pred_check_branch
        %359 = sbr.rel (%p357) target = $region115
      $region114: #{discriminator_forward.33} parent=5 // pred_region
        %s360 = ssub.s32 %s9, 2
        // Predicated region
        $region116: #{discriminator_forward.33} parent=114 // pred_check
          %p361 = pneg %p106
        $region117: #{discriminator_forward.33} parent=114 // pred_check_branch
          %363 = sbr.rel (%p361) target = $region119
        $region118: #{discriminator_forward.33} parent=114 // pred_region
          %s364 = sand.u32 %s91, 1
          %s365 = sand.u32 %s91, 1
          %s366 = smul.addr %s365, 16
          %s367 = scalar_lea.vmem [#allocation3], %s366
        $region119: #{discriminator_forward.33} parent=114 // pred_fallthru
          _
      $region115: #{discriminator_forward.33} parent=5 // pred_fallthru
        _
    $region6: #{discriminator_forward.33} parent=1 // loop_footer
      %s13 = sadd.s32 1, %s9
    $region7: #{discriminator_forward.33} parent=1 // loop_footer_branch
      %8 = sbr.rel target = $region3
    $region8: #{discriminator_forward.33} parent=1 // loop_exit
      _

// kernel: discriminator_forward.34
$region0: #{discriminator_forward.34}
  #allocation0 [shape = 'u32[]', space=smem, size = 0x4, offset = 0x4, fixed_abs, tag = 'smem constant byte address 0x4 - core index']
  #allocation1 [shape = 'u32[72,128]{1,0:T(1,128)}', space=vmem, size = 0x9000, scoped, tag = 'internal scratch']
  %s0 = inlined_call_operand.vmem [shape: bf16[16,80], index: 0, kind: input, shape index: {}]
  %s1 = inlined_call_operand.vmem [shape: bf16[80,256], index: 1, kind: input, shape index: {}]
  %s2 = inlined_call_operand.vmem [shape: f32[16,1], index: 2, kind: input, shape index: {}]
  %s3 = inlined_call_operand.vmem [shape: f32[16,256], index: 3, kind: output, shape index: {}]
  %s4 = sld [smem:[#allocation0]]
  $region120: #{discriminator_forward.34} parent=0
    _
  %s6 = ssub.s32 1, %s4
  %s7 = scalar_select 0, %s6, %s4
  $region1: #{discriminator_forward.34} parent=0
    #allocation2 [shape = 'u8[40960]{0}', space=vmem, size = 0xa000, scoped, tag = 'input window, operand 1']
    #allocation3 [shape = 'u8[16384]{0}', space=vmem, size = 0x4000, scoped, tag = 'output window, operand 0']
    loop: start=0, step=1, limit=4
    $region2: #{discriminator_forward.34} parent=1 // loop_pre_header
      _
    $region3: #{discriminator_forward.34} parent=1 // loop_header
      %s9 = sphi 0, %s13
      %p10 = scmp.ge.s32.totalorder %s9, 4
      %s17 = sphi 0, %s17
      %s19 = sphi 0, %s17
      %s20 = sphi 0, %s19
      %s34 = sphi 0, %s20
      %s40 = sphi 0, %s42
      %s43 = sphi 0, %s40
      %s44 = sphi 0, %s43
      %s60 = sphi 0, %s44
      %s64 = sphi 0, %s64
      %s66 = sphi 0, %s64
      %s67 = sphi 0, %s66
      %s81 = sphi 0, %s67
      %s87 = sphi 0, %s89
      %s90 = sphi 0, %s87
      %s91 = sphi 0, %s90
      %s107 = sphi 0, %s91
    $region4: #{discriminator_forward.34} parent=1 // loop_header_branch
      %12 = sbr.rel (%p10) target = $region8
    $region5: #{discriminator_forward.34} parent=1 // loop_body
      %s14 = ssub.s32 %s9, 1
      %s15 = ssub.s32 %s9, 2
      %s16 = sadd.s32 %s9, 1
      %s18 = sadd.s32 %s17, 1
      %p21 = scmp.eq.s32.totalorder %s9, 1
      %p22 = scmp.ne.s32.totalorder %s17, %s19
      %p23 = scmp.eq.s32.totalorder %s9, 0
      %p24 = por %p22, %p23
      %p25 = scmp.ne.s32.totalorder %s17, %s19
      %p26 = scmp.eq.s32.totalorder %s14, 1
      %p27 = por %p25, %p26
      %p28 = scmp.ne.s32.totalorder %s19, %s20
      %p29 = scmp.eq.s32.totalorder %s14, 0
      %p30 = por %p28, %p29
      %p31 = scmp.ne.s32.totalorder %s19, %s20
      %p32 = scmp.eq.s32.totalorder %s15, 1
      %p33 = por %p31, %p32
      %p35 = scmp.ne.s32.totalorder %s20, %s34
      %p36 = scmp.eq.s32.totalorder %s15, 0
      %p37 = por %p35, %p36
      %s38 = ssub.s32 %s9, %s16
      %p39 = scmp.eq.s32.totalorder %s38, 0
      %s41 = sadd.s32 %s40, 1
      %s42 = scalar_select %p39, %s40, %s41
      %p45 = pneg %p39
      %p46 = scmp.eq.s32.totalorder %s9, 1
      %p47 = por %p45, %p46
      %p48 = scmp.ne.s32.totalorder %s40, %s43
      %p49 = scmp.eq.s32.totalorder %s9, 0
      %p50 = por %p48, %p49
      %p51 = scmp.ne.s32.totalorder %s40, %s43
      %p52 = scmp.eq.s32.totalorder %s14, 1
      %p53 = por %p51, %p52
      %p54 = scmp.ne.s32.totalorder %s43, %s44
      %p55 = scmp.eq.s32.totalorder %s14, 0
      %p56 = por %p54, %p55
      %p57 = scmp.ne.s32.totalorder %s43, %s44
      %p58 = scmp.eq.s32.totalorder %s15, 1
      %p59 = por %p57, %p58
      %p61 = scmp.ne.s32.totalorder %s44, %s60
      %p62 = scmp.eq.s32.totalorder %s15, 0
      %p63 = por %p61, %p62
      %s65 = sadd.s32 %s64, 1
      %p68 = scmp.eq.s32.totalorder %s9, 1
      %p69 = scmp.ne.s32.totalorder %s64, %s66
      %p70 = scmp.eq.s32.totalorder %s9, 0
      %p71 = por %p69, %p70
      %p72 = scmp.ne.s32.totalorder %s64, %s66
      %p73 = scmp.eq.s32.totalorder %s14, 1
      %p74 = por %p72, %p73
      %p75 = scmp.ne.s32.totalorder %s66, %s67
      %p76 = scmp.eq.s32.totalorder %s14, 0
      %p77 = por %p75, %p76
      %p78 = scmp.ne.s32.totalorder %s66, %s67
      %p79 = scmp.eq.s32.totalorder %s15, 1
      %p80 = por %p78, %p79
      %p82 = scmp.ne.s32.totalorder %s67, %s81
      %p83 = scmp.eq.s32.totalorder %s15, 0
      %p84 = por %p82, %p83
      %s85 = ssub.s32 %s9, %s16
      %p86 = scmp.eq.s32.totalorder %s85, 0
      %s88 = sadd.s32 %s87, 1
      %s89 = scalar_select %p86, %s87, %s88
      %p92 = pneg %p86
      %p93 = scmp.eq.s32.totalorder %s9, 1
      %p94 = por %p92, %p93
      %p95 = scmp.ne.s32.totalorder %s87, %s90
      %p96 = scmp.eq.s32.totalorder %s9, 0
      %p97 = por %p95, %p96
      %p98 = scmp.ne.s32.totalorder %s87, %s90
      %p99 = scmp.eq.s32.totalorder %s14, 1
      %p100 = por %p98, %p99
      %p101 = scmp.ne.s32.totalorder %s90, %s91
      %p102 = scmp.eq.s32.totalorder %s14, 0
      %p103 = por %p101, %p102
      %p104 = scmp.ne.s32.totalorder %s90, %s91
      %p105 = scmp.eq.s32.totalorder %s15, 1
      %p106 = por %p104, %p105
      %p108 = scmp.ne.s32.totalorder %s91, %s107
      %p109 = scmp.eq.s32.totalorder %s15, 0
      %p110 = por %p108, %p109
      %p111 = scmp.le.s32.totalorder 1, %s9
      %p112 = scmp.lt.s32.totalorder %s9, 3
      %p113 = pnand %p111, %p112
      %p114 = pneg %p113
      // Predicated region
      $region9: #{discriminator_forward.34} parent=5 // pred_check
        _
      $region10: #{discriminator_forward.34} parent=5 // pred_check_branch
        %116 = sbr.rel (%p113) target = $region12
      $region11: #{discriminator_forward.34} parent=5 // pred_region
        %s117 = ssub.s32 %s9, 1
        // Predicated region
        $region13: #{discriminator_forward.34} parent=11 // pred_check
          %p118 = pneg %p30
        $region14: #{discriminator_forward.34} parent=11 // pred_check_branch
          %120 = sbr.rel (%p118) target = $region16
        $region15: #{discriminator_forward.34} parent=11 // pred_region
          _
        $region16: #{discriminator_forward.34} parent=11 // pred_fallthru
          _
        // Predicated region
        $region17: #{discriminator_forward.34} parent=11 // pred_check
          %p121 = pneg %p77
        $region18: #{discriminator_forward.34} parent=11 // pred_check_branch
          %123 = sbr.rel (%p121) target = $region20
        $region19: #{discriminator_forward.34} parent=11 // pred_region
          _
        $region20: #{discriminator_forward.34} parent=11 // pred_fallthru
          _
      $region12: #{discriminator_forward.34} parent=5 // pred_fallthru
        _
      %p124 = scmp.lt.s32.totalorder %s9, 2
      // Predicated region
      $region21: #{discriminator_forward.34} parent=5 // pred_check
        %p125 = pneg %p124
      $region22: #{discriminator_forward.34} parent=5 // pred_check_branch
        %127 = sbr.rel (%p125) target = $region24
      $region23: #{discriminator_forward.34} parent=5 // pred_region
        // Predicated region
        $region25: #{discriminator_forward.34} parent=23 // pred_check
          %p128 = pneg %p50
        $region26: #{discriminator_forward.34} parent=23 // pred_check_branch
          %130 = sbr.rel (%p128) target = $region28
        $region27: #{discriminator_forward.34} parent=23 // pred_region
          %s131 = sand.u32 %s40, 1
          %s132 = sand.u32 %s40, 1
          %s133 = smul.addr %s132, 40
          %s134 = scalar_lea.vmem [#allocation2], %s133
          %s135 = smul.addr %s9, 4
          %s136 = scalar_lea.vmem %s1, %s135
          // Predicated region
          $region29: #{discriminator_forward.34} parent=27 // pred_check
            _
          $region30: #{discriminator_forward.34} parent=27 // pred_check_branch
            %138 = sbr.rel (0) target = $region32
          $region31: #{discriminator_forward.34} parent=27 // pred_region
            // Predicated region
            $region33: #{discriminator_forward.34} parent=31 // pred_check
              _
            $region34: #{discriminator_forward.34} parent=31 // pred_check_branch
              %140 = sbr.rel target = $region36
            $region35: #{discriminator_forward.34} parent=31 // pred_region
              // Predicated region
              $region48: #{discriminator_forward.34} parent=35 // pred_check
                _
              $region49: #{discriminator_forward.34} parent=35 // pred_check_branch
                %174 = sbr.rel (0) target = $region51
              $region50: #{discriminator_forward.34} parent=35 // pred_region
                loop: start=0, step=1, limit=1
                $region52: #{discriminator_forward.34} parent=50 // loop_pre_header
                  _
                $region53: #{discriminator_forward.34} parent=50 // loop_header
                  %s176 = sphi 0, %s180
                  %p177 = scmp.ge.s32.totalorder %s176, 1
                  %s181 = sphi %s136, %s136
                  %s182 = sphi %s134, %s134
                $region54: #{discriminator_forward.34} parent=50 // loop_header_branch
                  %179 = sbr.rel (%p177) target = $region58
                $region55: #{discriminator_forward.34} parent=50 // loop_body
                  _
                $region56: #{discriminator_forward.34} parent=50 // loop_footer
                  %s180 = sadd.s32 1, %s176
                $region57: #{discriminator_forward.34} parent=50 // loop_footer_branch
                  %175 = sbr.rel target = $region53
                $region58: #{discriminator_forward.34} parent=50 // loop_exit
                  _
                %s184 = ssub.s32 16, 1
                loop: start=0, step=1, limit=1
                $region59: #{discriminator_forward.34} parent=50 // loop_pre_header
                  _
                $region60: #{discriminator_forward.34} parent=50 // loop_header
                  %s186 = sphi 0, %s190
                  %p187 = scmp.ge.s32.totalorder %s186, 1
                  %s191 = sphi %s136, %s136
                  %s192 = sphi %s134, %s134
                $region61: #{discriminator_forward.34} parent=50 // loop_header_branch
                  %189 = sbr.rel (%p187) target = $region65
                $region62: #{discriminator_forward.34} parent=50 // loop_body
                  %v193 = vld [vmem:[%s191] sm:%s184]
                  %194 = vst [vmem:[%s192] sm:%s184] %v193
                  %v195 = vld [vmem:[%s191 + $0x8] sm:%s184]
                  %196 = vst [vmem:[%s192 + $0x4] sm:%s184] %v195
                  %v197 = vld [vmem:[%s191 + $0x10] sm:%s184]
                  %198 = vst [vmem:[%s192 + $0x8] sm:%s184] %v197
                  %v199 = vld [vmem:[%s191 + $0x18] sm:%s184]
                  %200 = vst [vmem:[%s192 + $0xc] sm:%s184] %v199
                  %v201 = vld [vmem:[%s191 + $0x20] sm:%s184]
                  %202 = vst [vmem:[%s192 + $0x10] sm:%s184] %v201
                  %v203 = vld [vmem:[%s191 + $0x28] sm:%s184]
                  %204 = vst [vmem:[%s192 + $0x14] sm:%s184] %v203
                  %v205 = vld [vmem:[%s191 + $0x30] sm:%s184]
                  %206 = vst [vmem:[%s192 + $0x18] sm:%s184] %v205
                  %v207 = vld [vmem:[%s191 + $0x38] sm:%s184]
                  %208 = vst [vmem:[%s192 + $0x1c] sm:%s184] %v207
                  %v209 = vld [vmem:[%s191 + $0x40] sm:%s184]
                  %210 = vst [vmem:[%s192 + $0x20] sm:%s184] %v209
                  %v211 = vld [vmem:[%s191 + $0x48] sm:%s184]
                  %212 = vst [vmem:[%s192 + $0x24] sm:%s184] %v211
                $region63: #{discriminator_forward.34} parent=50 // loop_footer
                  %s190 = sadd.s32 1, %s186
                $region64: #{discriminator_forward.34} parent=50 // loop_footer_branch
                  %185 = sbr.rel target = $region60
                $region65: #{discriminator_forward.34} parent=50 // loop_exit
                  _
              $region51: #{discriminator_forward.34} parent=35 // pred_fallthru
                _
            $region36: #{discriminator_forward.34} parent=31 // pred_fallthru
              _
            // Predicated region
            $region37: #{discriminator_forward.34} parent=31 // pred_check
              _
            $region38: #{discriminator_forward.34} parent=31 // pred_check_branch
              %142 = sbr.rel (0) target = $region40
            $region39: #{discriminator_forward.34} parent=31 // pred_region
              %s144 = ssub.s32 16, 1
              loop: start=0, step=1, limit=1
              $region41: #{discriminator_forward.34} parent=39 // loop_pre_header
                _
              $region42: #{discriminator_forward.34} parent=39 // loop_header
                %s146 = sphi 0, %s150
                %p147 = scmp.ge.s32.totalorder %s146, 1
                %s151 = sphi %s136, %s136
                %s152 = sphi %s134, %s134
              $region43: #{discriminator_forward.34} parent=39 // loop_header_branch
                %149 = sbr.rel (%p147) target = $region47
              $region44: #{discriminator_forward.34} parent=39 // loop_body
                %v153 = vld [vmem:[%s151] sm:%s144]
                %154 = vst [vmem:[%s152] sm:%s144] %v153
                %v155 = vld [vmem:[%s151 + $0x8] sm:%s144]
                %156 = vst [vmem:[%s152 + $0x4] sm:%s144] %v155
                %v157 = vld [vmem:[%s151 + $0x10] sm:%s144]
                %158 = vst [vmem:[%s152 + $0x8] sm:%s144] %v157
                %v159 = vld [vmem:[%s151 + $0x18] sm:%s144]
                %160 = vst [vmem:[%s152 + $0xc] sm:%s144] %v159
                %v161 = vld [vmem:[%s151 + $0x20] sm:%s144]
                %162 = vst [vmem:[%s152 + $0x10] sm:%s144] %v161
                %v163 = vld [vmem:[%s151 + $0x28] sm:%s144]
                %164 = vst [vmem:[%s152 + $0x14] sm:%s144] %v163
                %v165 = vld [vmem:[%s151 + $0x30] sm:%s144]
                %166 = vst [vmem:[%s152 + $0x18] sm:%s144] %v165
                %v167 = vld [vmem:[%s151 + $0x38] sm:%s144]
                %168 = vst [vmem:[%s152 + $0x1c] sm:%s144] %v167
                %v169 = vld [vmem:[%s151 + $0x40] sm:%s144]
                %170 = vst [vmem:[%s152 + $0x20] sm:%s144] %v169
                %v171 = vld [vmem:[%s151 + $0x48] sm:%s144]
                %172 = vst [vmem:[%s152 + $0x24] sm:%s144] %v171
              $region45: #{discriminator_forward.34} parent=39 // loop_footer
                %s150 = sadd.s32 1, %s146
              $region46: #{discriminator_forward.34} parent=39 // loop_footer_branch
                %145 = sbr.rel target = $region42
              $region47: #{discriminator_forward.34} parent=39 // loop_exit
                _
            $region40: #{discriminator_forward.34} parent=31 // pred_fallthru
              _
          $region32: #{discriminator_forward.34} parent=27 // pred_fallthru
            _
          %213 = vnop
        $region28: #{discriminator_forward.34} parent=23 // pred_fallthru
          _
      $region24: #{discriminator_forward.34} parent=5 // pred_fallthru
        _
      %p214 = scmp.le.s32.totalorder 1, %s9
      %p215 = scmp.lt.s32.totalorder %s9, 3
      %p216 = pnand %p214, %p215
      %p217 = pneg %p216
      // Predicated region
      $region66: #{discriminator_forward.34} parent=5 // pred_check
        _
      $region67: #{discriminator_forward.34} parent=5 // pred_check_branch
        %219 = sbr.rel (%p216) target = $region69
      $region68: #{discriminator_forward.34} parent=5 // pred_region
        %s220 = ssub.s32 %s9, 1
        %s221 = sand.u32 %s43, 1
        %s222 = sand.u32 %s43, 1
        %s223 = smul.addr %s222, 40
        %s224 = scalar_lea.vmem [#allocation2], %s223
        // Predicated region
        $region70: #{discriminator_forward.34} parent=68 // pred_check
          %p225 = pneg %p56
        $region71: #{discriminator_forward.34} parent=68 // pred_check_branch
          %227 = sbr.rel (%p225) target = $region73
        $region72: #{discriminator_forward.34} parent=68 // pred_region
          _
        $region73: #{discriminator_forward.34} parent=68 // pred_fallthru
          _
        %p228 = pneg %p30
        %p229 = pneg %p27
        %s230 = sand.u32 %s43, 1
        %s231 = sand.u32 %s43, 1
        %s232 = smul.addr %s231, 40
        %s233 = scalar_lea.vmem [#allocation2], %s232
        %p234 = pneg %p56
        %p235 = pneg %p53
        %p236 = pneg %p77
        %p237 = pneg %p74
        %p238 = pneg %p103
        %p239 = pneg %p100
        %s240 = sand.u32 %s90, 1
        %s241 = sand.u32 %s90, 1
        %s242 = smul.addr %s241, 16
        %s243 = scalar_lea.vmem [#allocation3], %s242
        %v245 = vld [vmem:[%s0] sm:$0xf]
        %v246 = vld [vmem:[%s0 + $0x4] sm:$0xf]
        %v247 = vld [vmem:[%s224] sm:$0xf]
        %v248 = vld [vmem:[%s224 + $0x4] sm:$0xf]
        %v249 = vld [vmem:[%s224 + $0x8] sm:$0xf]
        %v250 = vld [vmem:[%s224 + $0xc] sm:$0xf]
        %v251 = vld [vmem:[%s224 + $0x10] sm:$0xf]
        %v252 = vld [vmem:[%s224 + $0x14] sm:$0xf]
        %v253 = vld [vmem:[%s224 + $0x18] sm:$0xf]
        %v254 = vld [vmem:[%s224 + $0x1c] sm:$0xf]
        %v255 = vld [vmem:[%s224 + $0x20] sm:$0xf]
        %v256 = vld [vmem:[%s224 + $0x24] sm:$0xf]
        %v257 = vld [vmem:[%s2] sm:$0xff]
        %v258 = vld [vmem:[%s2 + $0x8] sm:$0xff]
        %260 = vset.pattern.permute.xlu0 0
        %261 = vperm.xlu0 %260, %v257
        %v262 = vpop.permute.xlu0 %261
        %265 = vset.pattern.permute.xlu0 0
        %266 = vperm.xlu0 %265, %v258
        %v267 = vpop.permute.xlu0 %266
        %v271 = vunpack.c.l.b16 %v245
        %v272 = vunpack.c.l.b16 %v246
        %v273 = vpack.c.b16 %v272, %v271
        %v284 = vunpack.c.l.b16 %v247
        %v285 = vunpack.c.l.b16 %v248
        %v286 = vunpack.c.l.b16 %v249
        %v287 = vunpack.c.l.b16 %v250
        %v288 = vunpack.c.l.b16 %v251
        %v289 = vunpack.c.l.b16 %v252
        %v290 = vunpack.c.l.b16 %v253
        %v291 = vunpack.c.l.b16 %v254
        %v292 = vunpack.c.l.b16 %v255
        %v293 = vunpack.c.l.b16 %v256
        %v294 = vpack.c.b16 %v285, %v284
        %v295 = vpack.c.b16 %v287, %v286
        %v296 = vpack.c.b16 %v289, %v288
        %v297 = vpack.c.b16 %v291, %v290
        %v298 = vpack.c.b16 %v293, %v292
        %vm304 = vcmask 654336
        %v306 = vsel %vm304, %v273, 0
        %308 = vmatpush.bf16.msra.mxu0 0
        %309 = vmatpush.bf16.msra.mxu0 0
        %310 = vmatpush.bf16.msra.mxu0 0
        %311 = vmatpush.bf16.msra.mxu0 %v298
        %312 = vmatpush.bf16.msra.mxu0 %v297
        %313 = vmatpush.bf16.msra.mxu0 %v296
        %314 = vmatpush.bf16.msra.mxu0 %v295
        %315 = vmatpush.bf16.msra.mxu0 %v294
        %316 = vmatmul.bf16.gmra.mxu0 %v306
        %v317 = vpop.f32.mrf.mxu0
        %v318 = vadd.f32 %v262, %v317
        %v319 = vpop.f32.mrf.mxu0
        %v320 = vadd.f32 %v267, %v319
        %321 = vdwg.mxu0
        %vm322 = vcmp.gt.f32.partialorder %v318, 0.0
        %vm323 = vcmp.gt.f32.partialorder %v320, 0.0
        %v324 = vmul.f32 %v318, 0.1
        %v325 = vmul.f32 %v320, 0.1
        %v326 = vsel %vm322, %v318, %v324
        %v327 = vsel %vm323, %v320, %v325
        %328 = vst [vmem:[%s243] sm:$0xff] %v326
        %329 = vst [vmem:[%s243 + $0x8] sm:$0xff] %v327
        %s330 = sand.u32 %s90, 1
        %s331 = sand.u32 %s90, 1
        %s332 = smul.addr %s331, 16
        %s333 = scalar_lea.vmem [#allocation3], %s332
        // Predicated region
        $region74: #{discriminator_forward.34} parent=68 // pred_check
          %p334 = pneg %p100
        $region75: #{discriminator_forward.34} parent=68 // pred_check_branch
          %336 = sbr.rel (%p334) target = $region77
        $region76: #{discriminator_forward.34} parent=68 // pred_region
          %s337 = smul.addr %s14, 8
          %s338 = scalar_lea.vmem %s3, %s337
          // Predicated region
          $region78: #{discriminator_forward.34} parent=76 // pred_check
            _
          $region79: #{discriminator_forward.34} parent=76 // pred_check_branch
            %340 = sbr.rel (0) target = $region81
          $region80: #{discriminator_forward.34} parent=76 // pred_region
            // Predicated region
            $region82: #{discriminator_forward.34} parent=80 // pred_check
              _
            $region83: #{discriminator_forward.34} parent=80 // pred_check_branch
              %342 = sbr.rel (0) target = $region85
            $region84: #{discriminator_forward.34} parent=80 // pred_region
              // Predicated region
              $region97: #{discriminator_forward.34} parent=84 // pred_check
                _
              $region98: #{discriminator_forward.34} parent=84 // pred_check_branch
                %360 = sbr.rel (0) target = $region100
              $region99: #{discriminator_forward.34} parent=84 // pred_region
                loop: start=0, step=1, limit=1
                $region101: #{discriminator_forward.34} parent=99 // loop_pre_header
                  _
                $region102: #{discriminator_forward.34} parent=99 // loop_header
                  %s362 = sphi 0, %s366
                  %p363 = scmp.ge.s32.totalorder %s362, 1
                  %s367 = sphi %s333, %s333
                  %s368 = sphi %s338, %s338
                $region103: #{discriminator_forward.34} parent=99 // loop_header_branch
                  %365 = sbr.rel (%p363) target = $region107
                $region104: #{discriminator_forward.34} parent=99 // loop_body
                  %v369 = vld [vmem:[%s367] sm:$0xff]
                  %370 = vst [vmem:[%s368] sm:$0xff] %v369
                  %v371 = vld [vmem:[%s367 + $0x8] sm:$0xff]
                  %372 = vst [vmem:[%s368 + $0x10] sm:$0xff] %v371
                $region105: #{discriminator_forward.34} parent=99 // loop_footer
                  %s366 = sadd.s32 1, %s362
                $region106: #{discriminator_forward.34} parent=99 // loop_footer_branch
                  %361 = sbr.rel target = $region102
                $region107: #{discriminator_forward.34} parent=99 // loop_exit
                  _
              $region100: #{discriminator_forward.34} parent=84 // pred_fallthru
                _
              // Predicated region
              $region108: #{discriminator_forward.34} parent=84 // pred_check
                _
              $region109: #{discriminator_forward.34} parent=84 // pred_check_branch
                %374 = sbr.rel target = $region111
              $region110: #{discriminator_forward.34} parent=84 // pred_region
                _
              $region111: #{discriminator_forward.34} parent=84 // pred_fallthru
                _
            $region85: #{discriminator_forward.34} parent=80 // pred_fallthru
              _
            // Predicated region
            $region86: #{discriminator_forward.34} parent=80 // pred_check
              _
            $region87: #{discriminator_forward.34} parent=80 // pred_check_branch
              %344 = sbr.rel target = $region89
            $region88: #{discriminator_forward.34} parent=80 // pred_region
              %s346 = ssub.s32 256, 1
              loop: start=0, step=1, limit=1
              $region90: #{discriminator_forward.34} parent=88 // loop_pre_header
                _
              $region91: #{discriminator_forward.34} parent=88 // loop_header
                %s348 = sphi 0, %s352
                %p349 = scmp.ge.s32.totalorder %s348, 1
                %s353 = sphi %s333, %s333
                %s354 = sphi %s338, %s338
              $region92: #{discriminator_forward.34} parent=88 // loop_header_branch
                %351 = sbr.rel (%p349) target = $region96
              $region93: #{discriminator_forward.34} parent=88 // loop_body
                %v355 = vld [vmem:[%s353] sm:%s346]
                %356 = vst [vmem:[%s354] sm:%s346] %v355
                %v357 = vld [vmem:[%s353 + $0x8] sm:%s346]
                %358 = vst [vmem:[%s354 + $0x10] sm:%s346] %v357
              $region94: #{discriminator_forward.34} parent=88 // loop_footer
                %s352 = sadd.s32 1, %s348
              $region95: #{discriminator_forward.34} parent=88 // loop_footer_branch
                %347 = sbr.rel target = $region91
              $region96: #{discriminator_forward.34} parent=88 // loop_exit
                _
            $region89: #{discriminator_forward.34} parent=80 // pred_fallthru
              _
          $region81: #{discriminator_forward.34} parent=76 // pred_fallthru
            _
          %375 = vnop
        $region77: #{discriminator_forward.34} parent=68 // pred_fallthru
          _
      $region69: #{discriminator_forward.34} parent=5 // pred_fallthru
        _
      %p376 = scmp.le.s32.totalorder 2, %s9
      // Predicated region
      $region112: #{discriminator_forward.34} parent=5 // pred_check
        %p377 = pneg %p376
      $region113: #{discriminator_forward.34} parent=5 // pred_check_branch
        %379 = sbr.rel (%p377) target = $region115
      $region114: #{discriminator_forward.34} parent=5 // pred_region
        %s380 = ssub.s32 %s9, 2
        // Predicated region
        $region116: #{discriminator_forward.34} parent=114 // pred_check
          %p381 = pneg %p106
        $region117: #{discriminator_forward.34} parent=114 // pred_check_branch
          %383 = sbr.rel (%p381) target = $region119
        $region118: #{discriminator_forward.34} parent=114 // pred_region
          %s384 = sand.u32 %s91, 1
          %s385 = sand.u32 %s91, 1
          %s386 = smul.addr %s385, 16
          %s387 = scalar_lea.vmem [#allocation3], %s386
        $region119: #{discriminator_forward.34} parent=114 // pred_fallthru
          _
      $region115: #{discriminator_forward.34} parent=5 // pred_fallthru
        _
    $region6: #{discriminator_forward.34} parent=1 // loop_footer
      %s13 = sadd.s32 1, %s9
    $region7: #{discriminator_forward.34} parent=1 // loop_footer_branch
      %8 = sbr.rel target = $region3
    $region8: #{discriminator_forward.34} parent=1 // loop_exit
      _

// kernel: discriminator_forward.35
$region0: #{discriminator_forward.35}
  #allocation0 [shape = 'u32[]', space=smem, size = 0x4, offset = 0x4, fixed_abs, tag = 'smem constant byte address 0x4 - core index']
  #allocation1 [shape = 'u32[72,128]{1,0:T(1,128)}', space=vmem, size = 0x9000, scoped, tag = 'internal scratch']
  %s0 = inlined_call_operand.vmem [shape: bf16[8,48], index: 0, kind: input, shape index: {}]
  %s1 = inlined_call_operand.vmem [shape: bf16[48,256], index: 1, kind: input, shape index: {}]
  %s2 = inlined_call_operand.vmem [shape: f32[8,1], index: 2, kind: input, shape index: {}]
  %s3 = inlined_call_operand.vmem [shape: f32[8,256], index: 3, kind: output, shape index: {}]
  %s4 = sld [smem:[#allocation0]]
  $region86: #{discriminator_forward.35} parent=0
    _
  %s6 = ssub.s32 1, %s4
  %s7 = scalar_select 0, %s6, %s4
  $region1: #{discriminator_forward.35} parent=0
    #allocation2 [shape = 'u8[24576]{0}', space=vmem, size = 0x6000, scoped, tag = 'input window, operand 1']
    loop: start=0, step=1, limit=4
    $region2: #{discriminator_forward.35} parent=1 // loop_pre_header
      _
    $region3: #{discriminator_forward.35} parent=1 // loop_header
      %s9 = sphi 0, %s13
      %p10 = scmp.ge.s32.totalorder %s9, 4
      %s17 = sphi 0, %s17
      %s19 = sphi 0, %s17
      %s20 = sphi 0, %s19
      %s34 = sphi 0, %s20
      %s40 = sphi 0, %s42
      %s43 = sphi 0, %s40
      %s44 = sphi 0, %s43
      %s60 = sphi 0, %s44
      %s64 = sphi 0, %s64
      %s66 = sphi 0, %s64
      %s67 = sphi 0, %s66
      %s81 = sphi 0, %s67
      %s87 = sphi 0, %s89
      %s90 = sphi 0, %s87
      %s91 = sphi 0, %s90
      %s107 = sphi 0, %s91
    $region4: #{discriminator_forward.35} parent=1 // loop_header_branch
      %12 = sbr.rel (%p10) target = $region8
    $region5: #{discriminator_forward.35} parent=1 // loop_body
      %s14 = ssub.s32 %s9, 1
      %s15 = ssub.s32 %s9, 2
      %s16 = sadd.s32 %s9, 1
      %s18 = sadd.s32 %s17, 1
      %p21 = scmp.eq.s32.totalorder %s9, 1
      %p22 = scmp.ne.s32.totalorder %s17, %s19
      %p23 = scmp.eq.s32.totalorder %s9, 0
      %p24 = por %p22, %p23
      %p25 = scmp.ne.s32.totalorder %s17, %s19
      %p26 = scmp.eq.s32.totalorder %s14, 1
      %p27 = por %p25, %p26
      %p28 = scmp.ne.s32.totalorder %s19, %s20
      %p29 = scmp.eq.s32.totalorder %s14, 0
      %p30 = por %p28, %p29
      %p31 = scmp.ne.s32.totalorder %s19, %s20
      %p32 = scmp.eq.s32.totalorder %s15, 1
      %p33 = por %p31, %p32
      %p35 = scmp.ne.s32.totalorder %s20, %s34
      %p36 = scmp.eq.s32.totalorder %s15, 0
      %p37 = por %p35, %p36
      %s38 = ssub.s32 %s9, %s16
      %p39 = scmp.eq.s32.totalorder %s38, 0
      %s41 = sadd.s32 %s40, 1
      %s42 = scalar_select %p39, %s40, %s41
      %p45 = pneg %p39
      %p46 = scmp.eq.s32.totalorder %s9, 1
      %p47 = por %p45, %p46
      %p48 = scmp.ne.s32.totalorder %s40, %s43
      %p49 = scmp.eq.s32.totalorder %s9, 0
      %p50 = por %p48, %p49
      %p51 = scmp.ne.s32.totalorder %s40, %s43
      %p52 = scmp.eq.s32.totalorder %s14, 1
      %p53 = por %p51, %p52
      %p54 = scmp.ne.s32.totalorder %s43, %s44
      %p55 = scmp.eq.s32.totalorder %s14, 0
      %p56 = por %p54, %p55
      %p57 = scmp.ne.s32.totalorder %s43, %s44
      %p58 = scmp.eq.s32.totalorder %s15, 1
      %p59 = por %p57, %p58
      %p61 = scmp.ne.s32.totalorder %s44, %s60
      %p62 = scmp.eq.s32.totalorder %s15, 0
      %p63 = por %p61, %p62
      %s65 = sadd.s32 %s64, 1
      %p68 = scmp.eq.s32.totalorder %s9, 1
      %p69 = scmp.ne.s32.totalorder %s64, %s66
      %p70 = scmp.eq.s32.totalorder %s9, 0
      %p71 = por %p69, %p70
      %p72 = scmp.ne.s32.totalorder %s64, %s66
      %p73 = scmp.eq.s32.totalorder %s14, 1
      %p74 = por %p72, %p73
      %p75 = scmp.ne.s32.totalorder %s66, %s67
      %p76 = scmp.eq.s32.totalorder %s14, 0
      %p77 = por %p75, %p76
      %p78 = scmp.ne.s32.totalorder %s66, %s67
      %p79 = scmp.eq.s32.totalorder %s15, 1
      %p80 = por %p78, %p79
      %p82 = scmp.ne.s32.totalorder %s67, %s81
      %p83 = scmp.eq.s32.totalorder %s15, 0
      %p84 = por %p82, %p83
      %s85 = ssub.s32 %s9, %s16
      %p86 = scmp.eq.s32.totalorder %s85, 0
      %s88 = sadd.s32 %s87, 1
      %s89 = scalar_select %p86, %s87, %s88
      %p92 = pneg %p86
      %p93 = scmp.eq.s32.totalorder %s9, 1
      %p94 = por %p92, %p93
      %p95 = scmp.ne.s32.totalorder %s87, %s90
      %p96 = scmp.eq.s32.totalorder %s9, 0
      %p97 = por %p95, %p96
      %p98 = scmp.ne.s32.totalorder %s87, %s90
      %p99 = scmp.eq.s32.totalorder %s14, 1
      %p100 = por %p98, %p99
      %p101 = scmp.ne.s32.totalorder %s90, %s91
      %p102 = scmp.eq.s32.totalorder %s14, 0
      %p103 = por %p101, %p102
      %p104 = scmp.ne.s32.totalorder %s90, %s91
      %p105 = scmp.eq.s32.totalorder %s15, 1
      %p106 = por %p104, %p105
      %p108 = scmp.ne.s32.totalorder %s91, %s107
      %p109 = scmp.eq.s32.totalorder %s15, 0
      %p110 = por %p108, %p109
      %p111 = scmp.le.s32.totalorder 1, %s9
      %p112 = scmp.lt.s32.totalorder %s9, 3
      %p113 = pnand %p111, %p112
      %p114 = pneg %p113
      // Predicated region
      $region9: #{discriminator_forward.35} parent=5 // pred_check
        _
      $region10: #{discriminator_forward.35} parent=5 // pred_check_branch
        %116 = sbr.rel (%p113) target = $region12
      $region11: #{discriminator_forward.35} parent=5 // pred_region
        %s117 = ssub.s32 %s9, 1
        // Predicated region
        $region13: #{discriminator_forward.35} parent=11 // pred_check
          %p118 = pneg %p30
        $region14: #{discriminator_forward.35} parent=11 // pred_check_branch
          %120 = sbr.rel (%p118) target = $region16
        $region15: #{discriminator_forward.35} parent=11 // pred_region
          _
        $region16: #{discriminator_forward.35} parent=11 // pred_fallthru
          _
        // Predicated region
        $region17: #{discriminator_forward.35} parent=11 // pred_check
          %p121 = pneg %p77
        $region18: #{discriminator_forward.35} parent=11 // pred_check_branch
          %123 = sbr.rel (%p121) target = $region20
        $region19: #{discriminator_forward.35} parent=11 // pred_region
          _
        $region20: #{discriminator_forward.35} parent=11 // pred_fallthru
          _
      $region12: #{discriminator_forward.35} parent=5 // pred_fallthru
        _
      %p124 = scmp.lt.s32.totalorder %s9, 2
      // Predicated region
      $region21: #{discriminator_forward.35} parent=5 // pred_check
        %p125 = pneg %p124
      $region22: #{discriminator_forward.35} parent=5 // pred_check_branch
        %127 = sbr.rel (%p125) target = $region24
      $region23: #{discriminator_forward.35} parent=5 // pred_region
        // Predicated region
        $region25: #{discriminator_forward.35} parent=23 // pred_check
          %p128 = pneg %p50
        $region26: #{discriminator_forward.35} parent=23 // pred_check_branch
          %130 = sbr.rel (%p128) target = $region28
        $region27: #{discriminator_forward.35} parent=23 // pred_region
          %s131 = sand.u32 %s40, 1
          %s132 = sand.u32 %s40, 1
          %s133 = smul.addr %s132, 24
          %s134 = scalar_lea.vmem [#allocation2], %s133
          %s135 = smul.addr %s9, 4
          %s136 = scalar_lea.vmem %s1, %s135
          // Predicated region
          $region29: #{discriminator_forward.35} parent=27 // pred_check
            _
          $region30: #{discriminator_forward.35} parent=27 // pred_check_branch
            %138 = sbr.rel (0) target = $region32
          $region31: #{discriminator_forward.35} parent=27 // pred_region
            // Predicated region
            $region33: #{discriminator_forward.35} parent=31 // pred_check
              _
            $region34: #{discriminator_forward.35} parent=31 // pred_check_branch
              %140 = sbr.rel target = $region36
            $region35: #{discriminator_forward.35} parent=31 // pred_region
              // Predicated region
              $region48: #{discriminator_forward.35} parent=35 // pred_check
                _
              $region49: #{discriminator_forward.35} parent=35 // pred_check_branch
                %166 = sbr.rel (0) target = $region51
              $region50: #{discriminator_forward.35} parent=35 // pred_region
                loop: start=0, step=1, limit=1
                $region52: #{discriminator_forward.35} parent=50 // loop_pre_header
                  _
                $region53: #{discriminator_forward.35} parent=50 // loop_header
                  %s168 = sphi 0, %s172
                  %p169 = scmp.ge.s32.totalorder %s168, 1
                  %s173 = sphi %s136, %s136
                  %s174 = sphi %s134, %s134
                $region54: #{discriminator_forward.35} parent=50 // loop_header_branch
                  %171 = sbr.rel (%p169) target = $region58
                $region55: #{discriminator_forward.35} parent=50 // loop_body
                  _
                $region56: #{discriminator_forward.35} parent=50 // loop_footer
                  %s172 = sadd.s32 1, %s168
                $region57: #{discriminator_forward.35} parent=50 // loop_footer_branch
                  %167 = sbr.rel target = $region53
                $region58: #{discriminator_forward.35} parent=50 // loop_exit
                  _
                %s176 = ssub.s32 16, 1
                loop: start=0, step=1, limit=1
                $region59: #{discriminator_forward.35} parent=50 // loop_pre_header
                  _
                $region60: #{discriminator_forward.35} parent=50 // loop_header
                  %s178 = sphi 0, %s182
                  %p179 = scmp.ge.s32.totalorder %s178, 1
                  %s183 = sphi %s136, %s136
                  %s184 = sphi %s134, %s134
                $region61: #{discriminator_forward.35} parent=50 // loop_header_branch
                  %181 = sbr.rel (%p179) target = $region65
                $region62: #{discriminator_forward.35} parent=50 // loop_body
                  %v185 = vld [vmem:[%s183] sm:%s176]
                  %186 = vst [vmem:[%s184] sm:%s176] %v185
                  %v187 = vld [vmem:[%s183 + $0x8] sm:%s176]
                  %188 = vst [vmem:[%s184 + $0x4] sm:%s176] %v187
                  %v189 = vld [vmem:[%s183 + $0x10] sm:%s176]
                  %190 = vst [vmem:[%s184 + $0x8] sm:%s176] %v189
                  %v191 = vld [vmem:[%s183 + $0x18] sm:%s176]
                  %192 = vst [vmem:[%s184 + $0xc] sm:%s176] %v191
                  %v193 = vld [vmem:[%s183 + $0x20] sm:%s176]
                  %194 = vst [vmem:[%s184 + $0x10] sm:%s176] %v193
                  %v195 = vld [vmem:[%s183 + $0x28] sm:%s176]
                  %196 = vst [vmem:[%s184 + $0x14] sm:%s176] %v195
                $region63: #{discriminator_forward.35} parent=50 // loop_footer
                  %s182 = sadd.s32 1, %s178
                $region64: #{discriminator_forward.35} parent=50 // loop_footer_branch
                  %177 = sbr.rel target = $region60
                $region65: #{discriminator_forward.35} parent=50 // loop_exit
                  _
              $region51: #{discriminator_forward.35} parent=35 // pred_fallthru
                _
            $region36: #{discriminator_forward.35} parent=31 // pred_fallthru
              _
            // Predicated region
            $region37: #{discriminator_forward.35} parent=31 // pred_check
              _
            $region38: #{discriminator_forward.35} parent=31 // pred_check_branch
              %142 = sbr.rel (0) target = $region40
            $region39: #{discriminator_forward.35} parent=31 // pred_region
              %s144 = ssub.s32 16, 1
              loop: start=0, step=1, limit=1
              $region41: #{discriminator_forward.35} parent=39 // loop_pre_header
                _
              $region42: #{discriminator_forward.35} parent=39 // loop_header
                %s146 = sphi 0, %s150
                %p147 = scmp.ge.s32.totalorder %s146, 1
                %s151 = sphi %s136, %s136
                %s152 = sphi %s134, %s134
              $region43: #{discriminator_forward.35} parent=39 // loop_header_branch
                %149 = sbr.rel (%p147) target = $region47
              $region44: #{discriminator_forward.35} parent=39 // loop_body
                %v153 = vld [vmem:[%s151] sm:%s144]
                %154 = vst [vmem:[%s152] sm:%s144] %v153
                %v155 = vld [vmem:[%s151 + $0x8] sm:%s144]
                %156 = vst [vmem:[%s152 + $0x4] sm:%s144] %v155
                %v157 = vld [vmem:[%s151 + $0x10] sm:%s144]
                %158 = vst [vmem:[%s152 + $0x8] sm:%s144] %v157
                %v159 = vld [vmem:[%s151 + $0x18] sm:%s144]
                %160 = vst [vmem:[%s152 + $0xc] sm:%s144] %v159
                %v161 = vld [vmem:[%s151 + $0x20] sm:%s144]
                %162 = vst [vmem:[%s152 + $0x10] sm:%s144] %v161
                %v163 = vld [vmem:[%s151 + $0x28] sm:%s144]
                %164 = vst [vmem:[%s152 + $0x14] sm:%s144] %v163
              $region45: #{discriminator_forward.35} parent=39 // loop_footer
                %s150 = sadd.s32 1, %s146
              $region46: #{discriminator_forward.35} parent=39 // loop_footer_branch
                %145 = sbr.rel target = $region42
              $region47: #{discriminator_forward.35} parent=39 // loop_exit
                _
            $region40: #{discriminator_forward.35} parent=31 // pred_fallthru
              _
          $region32: #{discriminator_forward.35} parent=27 // pred_fallthru
            _
          %197 = vnop
        $region28: #{discriminator_forward.35} parent=23 // pred_fallthru
          _
      $region24: #{discriminator_forward.35} parent=5 // pred_fallthru
        _
      %p198 = scmp.le.s32.totalorder 1, %s9
      %p199 = scmp.lt.s32.totalorder %s9, 3
      %p200 = pnand %p198, %p199
      %p201 = pneg %p200
      // Predicated region
      $region66: #{discriminator_forward.35} parent=5 // pred_check
        _
      $region67: #{discriminator_forward.35} parent=5 // pred_check_branch
        %203 = sbr.rel (%p200) target = $region69
      $region68: #{discriminator_forward.35} parent=5 // pred_region
        %s204 = ssub.s32 %s9, 1
        %s205 = sand.u32 %s43, 1
        %s206 = sand.u32 %s43, 1
        %s207 = smul.addr %s206, 24
        %s208 = scalar_lea.vmem [#allocation2], %s207
        // Predicated region
        $region70: #{discriminator_forward.35} parent=68 // pred_check
          %p209 = pneg %p56
        $region71: #{discriminator_forward.35} parent=68 // pred_check_branch
          %211 = sbr.rel (%p209) target = $region73
        $region72: #{discriminator_forward.35} parent=68 // pred_region
          _
        $region73: #{discriminator_forward.35} parent=68 // pred_fallthru
          _
        %p212 = pneg %p30
        %p213 = pneg %p27
        %s214 = sand.u32 %s43, 1
        %s215 = sand.u32 %s43, 1
        %s216 = smul.addr %s215, 24
        %s217 = scalar_lea.vmem [#allocation2], %s216
        %p218 = pneg %p56
        %p219 = pneg %p53
        %p220 = pneg %p77
        %p221 = pneg %p74
        %p222 = pneg %p103
        %p223 = pneg %p100
        %p224 = scmp.lt.s32.totalorder %s14, 1
        %s225 = scalar_select %p224, %s14, 1
        %s226 = smul.addr %s225, 8
        %s227 = scalar_lea.vmem %s3, %s226
        %p228 = scmp.lt.s32.totalorder %s14, 1
        %s229 = scalar_select %p228, %s14, 1
        %s230 = smul.addr %s229, 8
        %s231 = scalar_lea.vmem %s3, %s230
        %v233 = vld [vmem:[%s0] sm:$0xf]
        %v234 = vld [vmem:[%s208] sm:$0xf]
        %v235 = vld [vmem:[%s208 + $0x4] sm:$0xf]
        %v236 = vld [vmem:[%s208 + $0x8] sm:$0xf]
        %v237 = vld [vmem:[%s208 + $0xc] sm:$0xf]
        %v238 = vld [vmem:[%s208 + $0x10] sm:$0xf]
        %v239 = vld [vmem:[%s208 + $0x14] sm:$0xf]
        %v240 = vld [vmem:[%s2] sm:$0xff]
        %242 = vset.pattern.permute.xlu0 0
        %243 = vperm.xlu0 %242, %v240
        %v244 = vpop.permute.xlu0 %243
        %v252 = vunpack.c.l.b16 %v234
        %v253 = vunpack.c.l.b16 %v235
        %v254 = vunpack.c.l.b16 %v236
        %v255 = vunpack.c.l.b16 %v237
        %v256 = vunpack.c.l.b16 %v238
        %v257 = vunpack.c.l.b16 %v239
        %v258 = vpack.c.b16 %v253, %v252
        %v259 = vpack.c.b16 %v255, %v254
        %v260 = vpack.c.b16 %v257, %v256
        %vm264 = vcmask 392192
        %v266 = vsel %vm264, %v233, 0
        %268 = vmatpush.bf16.msra.mxu0 0
        %269 = vmatpush.bf16.msra.mxu0 0
        %270 = vmatpush.bf16.msra.mxu0 0
        %271 = vmatpush.bf16.msra.mxu0 0
        %272 = vmatpush.bf16.msra.mxu0 0
        %273 = vmatpush.bf16.msra.mxu0 %v260
        %274 = vmatpush.bf16.msra.mxu0 %v259
        %275 = vmatpush.bf16.msra.mxu0 %v258
        %276 = vmatmul.bf16.gmra.mxu0 %v266
        %v277 = vpop.f32.mrf.mxu0
        %v278 = vadd.f32 %v244, %v277
        %v279 = vpop.f32.mrf.mxu0
        %280 = vdwg.mxu0
        %281 = vst [vmem:[%s231] sm:$0xff] %v278
        %p282 = scmp.lt.s32.totalorder %s14, 1
        %s283 = scalar_select %p282, %s14, 1
        %s284 = smul.addr %s283, 8
        %s285 = scalar_lea.vmem %s3, %s284
        // Predicated region
        $region74: #{discriminator_forward.35} parent=68 // pred_check
          %p286 = pneg %p100
        $region75: #{discriminator_forward.35} parent=68 // pred_check_branch
          %288 = sbr.rel (%p286) target = $region77
        $region76: #{discriminator_forward.35} parent=68 // pred_region
          _
        $region77: #{discriminator_forward.35} parent=68 // pred_fallthru
          _
      $region69: #{discriminator_forward.35} parent=5 // pred_fallthru
        _
      %p289 = scmp.le.s32.totalorder 2, %s9
      // Predicated region
      $region78: #{discriminator_forward.35} parent=5 // pred_check
        %p290 = pneg %p289
      $region79: #{discriminator_forward.35} parent=5 // pred_check_branch
        %292 = sbr.rel (%p290) target = $region81
      $region80: #{discriminator_forward.35} parent=5 // pred_region
        %s293 = ssub.s32 %s9, 2
        // Predicated region
        $region82: #{discriminator_forward.35} parent=80 // pred_check
          %p294 = pneg %p106
        $region83: #{discriminator_forward.35} parent=80 // pred_check_branch
          %296 = sbr.rel (%p294) target = $region85
        $region84: #{discriminator_forward.35} parent=80 // pred_region
          %p297 = scmp.lt.s32.totalorder %s15, 1
          %s298 = scalar_select %p297, %s15, 1
          %s299 = smul.addr %s298, 8
          %s300 = scalar_lea.vmem %s3, %s299
        $region85: #{discriminator_forward.35} parent=80 // pred_fallthru
          _
      $region81: #{discriminator_forward.35} parent=5 // pred_fallthru
        _
    $region6: #{discriminator_forward.35} parent=1 // loop_footer
      %s13 = sadd.s32 1, %s9
    $region7: #{discriminator_forward.35} parent=1 // loop_footer_branch
      %8 = sbr.rel target = $region3
    $region8: #{discriminator_forward.35} parent=1 // loop_exit
      _

// kernel: discriminator_forward.37
$region0: #{discriminator_forward.37}
  #allocation0 [shape = 'u32[]', space=smem, size = 0x4, offset = 0x4, fixed_abs, tag = 'smem constant byte address 0x4 - core index']
  #allocation1 [shape = 'u32[72,128]{1,0:T(1,128)}', space=vmem, size = 0x9000, scoped, tag = 'internal scratch']
  %s0 = inlined_call_operand.vmem [shape: bf16[16,56], index: 0, kind: input, shape index: {}]
  %s1 = inlined_call_operand.vmem [shape: bf16[56,128], index: 1, kind: input, shape index: {}]
  %s2 = inlined_call_operand.vmem [shape: f32[16,1], index: 2, kind: input, shape index: {}]
  %s3 = inlined_call_operand.vmem [shape: f32[16,128], index: 3, kind: output, shape index: {}]
  %s4 = sld [smem:[#allocation0]]
  $region22: #{discriminator_forward.37} parent=0
    _
  %s6 = ssub.s32 1, %s4
  %s7 = scalar_select 0, %s6, %s4
  // Predicated region
  $region2: #{discriminator_forward.37} parent=0 // pred_check
    _
  $region3: #{discriminator_forward.37} parent=0 // pred_check_branch
    %9 = sbr.rel (0) target = $region5
  $region4: #{discriminator_forward.37} parent=0 // pred_region
    _
  $region5: #{discriminator_forward.37} parent=0 // pred_fallthru
    _
  // Predicated region
  $region6: #{discriminator_forward.37} parent=0 // pred_check
    _
  $region7: #{discriminator_forward.37} parent=0 // pred_check_branch
    %11 = sbr.rel (0) target = $region9
  $region8: #{discriminator_forward.37} parent=0 // pred_region
    _
  $region9: #{discriminator_forward.37} parent=0 // pred_fallthru
    _
  // Predicated region
  $region10: #{discriminator_forward.37} parent=0 // pred_check
    _
  $region11: #{discriminator_forward.37} parent=0 // pred_check_branch
    %13 = sbr.rel (0) target = $region13
  $region12: #{discriminator_forward.37} parent=0 // pred_region
    _
  $region13: #{discriminator_forward.37} parent=0 // pred_fallthru
    _
  %v15 = vld [vmem:[%s0] sm:$0xf]
  %v16 = vld [vmem:[%s0 + $0x4] sm:$0xf]
  %v17 = vld [vmem:[%s1] sm:$0xf]
  %v18 = vld [vmem:[%s1 + $0x4] sm:$0xf]
  %v19 = vld [vmem:[%s1 + $0x8] sm:$0xf]
  %v20 = vld [vmem:[%s1 + $0xc] sm:$0xf]
  %v21 = vld [vmem:[%s1 + $0x10] sm:$0xf]
  %v22 = vld [vmem:[%s1 + $0x14] sm:$0xf]
  %v23 = vld [vmem:[%s1 + $0x18] sm:$0xf]
  %v24 = vld [vmem:[%s2] sm:$0xff]
  %v25 = vld [vmem:[%s2 + $0x8] sm:$0xff]
  %27 = vset.pattern.permute.xlu0 0
  %28 = vperm.xlu0 %27, %v24
  %v29 = vpop.permute.xlu0 %28
  %32 = vset.pattern.permute.xlu0 0
  %33 = vperm.xlu0 %32, %v25
  %v34 = vpop.permute.xlu0 %33
  %v38 = vunpack.c.l.b16 %v15
  %v39 = vunpack.c.l.b16 %v16
  %v40 = vpack.c.b16 %v39, %v38
  %v48 = vunpack.c.l.b16 %v17
  %v49 = vunpack.c.l.b16 %v18
  %v50 = vunpack.c.l.b16 %v19
  %v51 = vunpack.c.l.b16 %v20
  %v52 = vunpack.c.l.b16 %v21
  %v53 = vunpack.c.l.b16 %v22
  %v54 = vunpack.c.l.b16 %v23
  %v55 = vpack.c.b16 %v49, %v48
  %v56 = vpack.c.b16 %v51, %v50
  %v57 = vpack.c.b16 %v53, %v52
  %v58 = vpack.c.b16 %v54, %v54
  %vm62 = vcmask 457728
  %v64 = vsel %vm62, %v40, 0
  %vm66 = vcmask 1043456
  %v68 = vsel %vm66, %v58, 0
  %70 = vmatpush.bf16.msra.mxu0 0
  %71 = vmatpush.bf16.msra.mxu0 0
  %72 = vmatpush.bf16.msra.mxu0 0
  %73 = vmatpush.bf16.msra.mxu0 0
  %74 = vmatpush.bf16.msra.mxu0 %v68
  %75 = vmatpush.bf16.msra.mxu0 %v57
  %76 = vmatpush.bf16.msra.mxu0 %v56
  %77 = vmatpush.bf16.msra.mxu0 %v55
  %78 = vmatmul.bf16.gmra.mxu0 %v64
  %v79 = vpop.f32.mrf.mxu0
  %v80 = vadd.f32 %v29, %v79
  %v81 = vpop.f32.mrf.mxu0
  %v82 = vadd.f32 %v34, %v81
  %83 = vdwg.mxu0
  %vm84 = vcmp.gt.f32.partialorder %v80, 0.0
  %vm85 = vcmp.gt.f32.partialorder %v82, 0.0
  %v86 = vmul.f32 %v80, 0.1
  %v87 = vmul.f32 %v82, 0.1
  %v88 = vsel %vm84, %v80, %v86
  %v89 = vsel %vm85, %v82, %v87
  %90 = vst [vmem:[%s3] sm:$0xff] %v88
  %91 = vst [vmem:[%s3 + $0x8] sm:$0xff] %v89
  // Predicated region
  $region14: #{discriminator_forward.37} parent=0 // pred_check
    _
  $region15: #{discriminator_forward.37} parent=0 // pred_check_branch
    %93 = sbr.rel (0) target = $region17
  $region16: #{discriminator_forward.37} parent=0 // pred_region
    _
  $region17: #{discriminator_forward.37} parent=0 // pred_fallthru
    _
  // Predicated region
  $region18: #{discriminator_forward.37} parent=0 // pred_check
    _
  $region19: #{discriminator_forward.37} parent=0 // pred_check_branch
    %95 = sbr.rel (0) target = $region21
  $region20: #{discriminator_forward.37} parent=0 // pred_region
    _
  $region21: #{discriminator_forward.37} parent=0 // pred_fallthru
    _

// kernel: discriminator_forward.40
$region0: #{discriminator_forward.40}
  #allocation0 [shape = 'u32[]', space=smem, size = 0x4, offset = 0x4, fixed_abs, tag = 'smem constant byte address 0x4 - core index']
  #allocation1 [shape = 'u32[72,128]{1,0:T(1,128)}', space=vmem, size = 0x9000, scoped, tag = 'internal scratch']
  %s0 = inlined_call_operand.vmem [shape: bf16[8,8], index: 0, kind: input, shape index: {}]
  %s1 = inlined_call_operand.vmem [shape: bf16[8,128], index: 1, kind: input, shape index: {}]
  %s2 = inlined_call_operand.vmem [shape: f32[8,1], index: 2, kind: input, shape index: {}]
  %s3 = inlined_call_operand.vmem [shape: f32[8,128], index: 3, kind: output, shape index: {}]
  %s4 = sld [smem:[#allocation0]]
  $region22: #{discriminator_forward.40} parent=0
    _
  %s6 = ssub.s32 1, %s4
  %s7 = scalar_select 0, %s6, %s4
  // Predicated region
  $region2: #{discriminator_forward.40} parent=0 // pred_check
    _
  $region3: #{discriminator_forward.40} parent=0 // pred_check_branch
    %9 = sbr.rel (0) target = $region5
  $region4: #{discriminator_forward.40} parent=0 // pred_region
    _
  $region5: #{discriminator_forward.40} parent=0 // pred_fallthru
    _
  // Predicated region
  $region6: #{discriminator_forward.40} parent=0 // pred_check
    _
  $region7: #{discriminator_forward.40} parent=0 // pred_check_branch
    %11 = sbr.rel (0) target = $region9
  $region8: #{discriminator_forward.40} parent=0 // pred_region
    _
  $region9: #{discriminator_forward.40} parent=0 // pred_fallthru
    _
  // Predicated region
  $region10: #{discriminator_forward.40} parent=0 // pred_check
    _
  $region11: #{discriminator_forward.40} parent=0 // pred_check_branch
    %13 = sbr.rel (0) target = $region13
  $region12: #{discriminator_forward.40} parent=0 // pred_region
    _
  $region13: #{discriminator_forward.40} parent=0 // pred_fallthru
    _
  %v15 = vld [vmem:[%s0] sm:$0xf]
  %v16 = vld [vmem:[%s1] sm:$0xf]
  %v17 = vld [vmem:[%s2] sm:$0xff]
  %19 = vset.pattern.permute.xlu0 0
  %20 = vperm.xlu0 %19, %v17
  %v21 = vpop.permute.xlu0 %20
  %vm23 = vcmask 64512
  %v25 = vsel %vm23, %v15, 0
  %vm27 = vcmask 1043456
  %v29 = vsel %vm27, %v16, 0
  %31 = vmatpush.bf16.msra.mxu0 0
  %32 = vmatpush.bf16.msra.mxu0 0
  %33 = vmatpush.bf16.msra.mxu0 0
  %34 = vmatpush.bf16.msra.mxu0 0
  %35 = vmatpush.bf16.msra.mxu0 0
  %36 = vmatpush.bf16.msra.mxu0 0
  %37 = vmatpush.bf16.msra.mxu0 0
  %38 = vmatpush.bf16.msra.mxu0 %v29
  %39 = vmatmul.bf16.gmra.mxu0 %v25
  %v40 = vpop.f32.mrf.mxu0
  %v41 = vadd.f32 %v21, %v40
  %v42 = vpop.f32.mrf.mxu0
  %43 = vdwg.mxu0
  %vm44 = vcmp.gt.f32.partialorder %v41, 0.0
  %v45 = vmul.f32 %v41, 0.1
  %v46 = vsel %vm44, %v41, %v45
  %47 = vst [vmem:[%s3] sm:$0xff] %v46
  // Predicated region
  $region14: #{discriminator_forward.40} parent=0 // pred_check
    _
  $region15: #{discriminator_forward.40} parent=0 // pred_check_branch
    %49 = sbr.rel (0) target = $region17
  $region16: #{discriminator_forward.40} parent=0 // pred_region
    _
  $region17: #{discriminator_forward.40} parent=0 // pred_fallthru
    _
  // Predicated region
  $region18: #{discriminator_forward.40} parent=0 // pred_check
    _
  $region19: #{discriminator_forward.40} parent=0 // pred_check_branch
    %51 = sbr.rel (0) target = $region21
  $region20: #{discriminator_forward.40} parent=0 // pred_region
    _
  $region21: #{discriminator_forward.40} parent=0 // pred_fallthru
    _

</llo_original>
